<compile_context>
chip_gen: v6e
topology: v6e:2x2x1
jax: 0.10.0
libtpu: 0.0.40
codegen_flags: <defaults>
</compile_context>

<pallas_src>
import math

import jax
import jax.numpy as jnp
from jax.experimental import pallas as pl
from jax.experimental.pallas import tpu as pltpu


def phi_mlp_kernel(x_ref, w1_ref, b1_ref, w2_ref, b2_ref, w3_ref, b3_ref, o_ref):
    """One row-tile of the fused 3-layer MLP, entirely in VMEM.

    x_ref:  (block_rows, P*d_in)   in the compute dtype (f32 or bf16)
    wK_ref: P-fold block-diagonal weights, compute dtype
    bK_ref: (1, P*dK) biases, f32
    Matmuls accumulate in f32 on the MXU; bias-add/ReLU stay in f32 and the
    operands are cast back to the compute dtype before the next MXU pass.
    """
    x = x_ref[...]
    cdt = x.dtype

    h = jnp.dot(x, w1_ref[...], preferred_element_type=jnp.float32) + b1_ref[...]
    h = jnp.maximum(h, 0.0).astype(cdt)

    h = jnp.dot(h, w2_ref[...], preferred_element_type=jnp.float32) + b2_ref[...]
    h = jnp.maximum(h, 0.0).astype(cdt)

    o = jnp.dot(h, w3_ref[...], preferred_element_type=jnp.float32) + b3_ref[...]
    o_ref[...] = o.astype(o_ref.dtype)


def _block_diag(w, p):
    """(d_in, d_out) -> (p*d_in, p*d_out) block-diagonal replication of w."""
    d_in, d_out = w.shape
    eye = jnp.eye(p, dtype=w.dtype)
    blk = eye[:, None, :, None] * w[None, :, None, :]        # (p, d_in, p, d_out)
    return blk.reshape(p * d_in, p * d_out)


def _auto_pack(d_in, d_out, max_pack=32):
    """Smallest row-pack factor making both p*d_in and p*d_out multiples of 128."""
    p_in = 128 // math.gcd(128, d_in)
    p_out = 128 // math.gcd(128, d_out)
    p = p_in * p_out // math.gcd(p_in, p_out)                # lcm
    return p if p <= max_pack else 1


def phi_forward(x, params, *, block_rows=256, pack=None, compute_dtype=None):
    """Fused Phi MLP: relu(relu(x@W1+b1)@W2+b2)@W3+b3, tiled over rows.

    x:             (M, d_in); flatten any leading batch/set dims before calling.
    params:        ((w1, b1), (w2, b2), (w3, b3)); wK already (in, out),
                   bK shaped (1, out).
    block_rows:    row tile measured in *packed* rows (each packed row holds
                   `pack` logical rows).  Sweep 128-1024 on real workloads.
    compute_dtype: operand dtype fed to the MXU (f32 or bf16); accumulation is
                   always f32.
    """
    (w1, b1), (w2, b2), (w3, b3) = params
    M, d_in = x.shape
    d_out = w3.shape[1]

    out_dtype = x.dtype
    if compute_dtype is None:
        compute_dtype = x.dtype
    compute_dtype = jnp.dtype(compute_dtype)

    if pack is None:
        pack = _auto_pack(d_in, d_out)
    assert pack >= 1

    # Row tiling (in packed rows). Sublane granule: 8 for f32, 16 for bf16.
    sub = 16 if compute_dtype == jnp.bfloat16 else 8
    m_packed = pl.cdiv(M, pack)
    block_rows = max(sub, (min(block_rows, m_packed) // sub) * sub)
    n_blocks = pl.cdiv(m_packed, block_rows)
    m_packed_pad = n_blocks * block_rows
    m_pad = m_packed_pad * pack

    # --- wrapper-side (free, one-off) layout plumbing ------------------------
    # Pad rows so the grid divides evenly, then view the contiguous
    # (m_pad, d_in) buffer as a lane-dense (m_packed_pad, pack*d_in) slab.
    x_p = x
    if m_pad != M:
        x_p = jnp.pad(x, ((0, m_pad - M), (0, 0)))
    x_p = x_p.astype(compute_dtype).reshape(m_packed_pad, pack * d_in)

    # Block-diagonal weights keep the packed matmul exactly equal to the
    # per-row matmul while making every contraction/output dim a multiple of
    # 128 lanes.
    w1p = _block_diag(w1.astype(compute_dtype), pack)        # (P*d_in, P*h1)
    w2p = _block_diag(w2.astype(compute_dtype), pack)        # (P*h1,  P*h2)
    w3p = _block_diag(w3.astype(compute_dtype), pack)        # (P*h2,  P*d_out)
    b1p = jnp.tile(b1.astype(jnp.float32), (1, pack))        # (1, P*h1)
    b2p = jnp.tile(b2.astype(jnp.float32), (1, pack))        # (1, P*h2)
    b3p = jnp.tile(b3.astype(jnp.float32), (1, pack))        # (1, P*d_out)

    # --- specs ---------------------------------------------------------------
    grid = (n_blocks,)
    const = lambda shape: pl.BlockSpec(shape, lambda i: (0, 0))  # VMEM-resident

    in_specs = [
        pl.BlockSpec((block_rows, pack * d_in), lambda i: (i, 0)),   # x tile
        const(w1p.shape), const(b1p.shape),
        const(w2p.shape), const(b2p.shape),
        const(w3p.shape), const(b3p.shape),
    ]
    out_specs = pl.BlockSpec((block_rows, pack * d_out), lambda i: (i, 0))

    comp_sz = compute_dtype.itemsize
    out_sz = jnp.dtype(out_dtype).itemsize
    x_tile_bytes = block_rows * pack * d_in * comp_sz
    o_tile_bytes = block_rows * pack * d_out * out_sz
    w_bytes = (w1p.size + w2p.size + w3p.size) * comp_sz
    b_bytes = (b1p.size + b2p.size + b3p.size) * 4
    vmem_limit = int(min(2 * (x_tile_bytes + o_tile_bytes)
                         + 2 * (w_bytes + b_bytes) + (16 << 20), 64 << 20))

    cost = pl.CostEstimate(
        flops=int(2 * m_packed_pad * (w1p.size + w2p.size + w3p.size)),
        transcendentals=0,
        bytes_accessed=int(x_p.size * comp_sz
                           + m_packed_pad * pack * d_out * out_sz
                           + w_bytes + b_bytes),
    )

    out_packed = pl.pallas_call(
        phi_mlp_kernel,
        out_shape=jax.ShapeDtypeStruct((m_packed_pad, pack * d_out), out_dtype),
        grid=grid,
        in_specs=in_specs,
        out_specs=out_specs,
        compiler_params=pltpu.CompilerParams(
            dimension_semantics=("parallel",),   # shard rows across TensorCores
            vmem_limit_bytes=vmem_limit,
        ),
        cost_estimate=cost,
    )(x_p, w1p, b1p, w2p, b2p, w3p, b3p)

    # Free reshape back to logical (M, d_out) rows; drop padding.
    return out_packed.reshape(m_pad, d_out)[:M]


def init_linear(key, fan_in, fan_out, dtype=jnp.float32):
    """PyTorch nn.Linear default init (uniform +-1/sqrt(fan_in)).

    Returns weight already transposed to (fan_in, fan_out) and bias (1, fan_out).
    """
    kw, kb = jax.random.split(key)
    bound = 1.0 / math.sqrt(fan_in)
    w = jax.random.uniform(kw, (fan_in, fan_out), dtype, -bound, bound)
    b = jax.random.uniform(kb, (1, fan_out), dtype, -bound, bound)
    return w, b


def phi_forward_ref(x, params):
    """Pure-JAX reference matching the PyTorch Phi.forward semantics."""
    (w1, b1), (w2, b2), (w3, b3) = params
    h = jnp.maximum(x @ w1 + b1, 0.0)
    h = jnp.maximum(h @ w2 + b2, 0.0)
    return h @ w3 + b3


if __name__ == "__main__":
    key = jax.random.PRNGKey(0)
    k_x, k1, k2, k3 = jax.random.split(key, 4)

    # DeepSets-style shapes: Phi is applied per set element.
    batch, set_size, d_in, hidden, d_out = 32, 32, 16, 32, 8

    x_set = jax.random.normal(k_x, (batch, set_size, d_in), jnp.float32)
    params = (
        init_linear(k1, d_in, hidden),
        init_linear(k2, hidden, hidden),
        init_linear(k3, hidden, d_out),
    )

    # Flatten the set dimension into rows so M is large.
    x = x_set.reshape(-1, d_in)                          # (1024, 16)
    ref = phi_forward_ref(x, params)

    # f32 path; small block_rows so even this tiny demo runs a multi-step
    # (pipelined, core-parallel) grid.
    out = phi_forward(x, params, block_rows=16)
    out = jax.block_until_ready(out)
    assert out.shape == (batch * set_size, d_out)
    assert jnp.allclose(out, ref, atol=1e-5, rtol=1e-5), "f32 mismatch vs reference"

    # bf16-operand path (f32 accumulation) -- looser tolerance.
    out_bf16 = phi_forward(x, params, block_rows=16, compute_dtype=jnp.bfloat16)
    out_bf16 = jax.block_until_ready(out_bf16)
    assert jnp.allclose(out_bf16, ref, atol=1e-1, rtol=1e-1), "bf16 mismatch vs reference"

    print("KERNEL_OK")
</pallas_src>

<mosaic_0001>
module attributes {stable_mosaic.version = 11 : i64} {
  func.func @phi_mlp_kernel(%arg0: i32, %arg1: memref<16x256xf32, #tpu.memory_space<vmem>>, %arg2: memref<256x512xf32, #tpu.memory_space<vmem>>, %arg3: memref<1x512xf32, #tpu.memory_space<vmem>>, %arg4: memref<512x512xf32, #tpu.memory_space<vmem>>, %arg5: memref<1x512xf32, #tpu.memory_space<vmem>>, %arg6: memref<512x128xf32, #tpu.memory_space<vmem>>, %arg7: memref<1x128xf32, #tpu.memory_space<vmem>>, %arg8: memref<16x128xf32, #tpu.memory_space<vmem>>) attributes {dimension_semantics = [#tpu.dimension_semantics<parallel>], iteration_bounds = array<i64: 4>, scalar_prefetch = 0 : i64, scratch_operands = 0 : i64, tpu.core_type = #tpu.core_type<tc>, window_params = [{transform_indices = @transform_0, window_bounds = array<i64: 16, 256>}, {pipeline_mode = #tpu.pipeline_mode<synchronous>, transform_indices = @transform_1, window_bounds = array<i64: 256, 512>}, {pipeline_mode = #tpu.pipeline_mode<synchronous>, transform_indices = @transform_2, window_bounds = array<i64: 1, 512>}, {pipeline_mode = #tpu.pipeline_mode<synchronous>, transform_indices = @transform_3, window_bounds = array<i64: 512, 512>}, {pipeline_mode = #tpu.pipeline_mode<synchronous>, transform_indices = @transform_4, window_bounds = array<i64: 1, 512>}, {pipeline_mode = #tpu.pipeline_mode<synchronous>, transform_indices = @transform_5, window_bounds = array<i64: 512, 128>}, {pipeline_mode = #tpu.pipeline_mode<synchronous>, transform_indices = @transform_6, window_bounds = array<i64: 1, 128>}, {transform_indices = @transform_7, window_bounds = array<i64: 16, 128>}]} {
    %c0 = arith.constant 0 : index
    %c0_0 = arith.constant 0 : index
    %0 = vector.load %arg1[%c0, %c0_0] : memref<16x256xf32, #tpu.memory_space<vmem>>, vector<16x256xf32>
    %c0_1 = arith.constant 0 : index
    %c0_2 = arith.constant 0 : index
    %1 = vector.load %arg2[%c0_1, %c0_2] : memref<256x512xf32, #tpu.memory_space<vmem>>, vector<256x512xf32>
    %cst = arith.constant dense<0.000000e+00> : vector<16x512xf32>
    %2 = tpu.matmul %0, %1, %cst {dimension_numbers = #tpu.dot_dimension_numbers<[1], [0], [0], [1], [0, 0, 1, 1], [], []>} : vector<16x256xf32>, vector<256x512xf32>, vector<16x512xf32> -> vector<16x512xf32>
    %c0_3 = arith.constant 0 : index
    %c0_4 = arith.constant 0 : index
    %3 = vector.load %arg3[%c0_3, %c0_4] : memref<1x512xf32, #tpu.memory_space<vmem>>, vector<1x512xf32>
    %4 = vector.broadcast %3 : vector<1x512xf32> to vector<16x512xf32>
    %5 = arith.addf %2, %4 : vector<16x512xf32>
    %cst_5 = arith.constant 0.000000e+00 : f32
    %6 = vector.broadcast %cst_5 : f32 to vector<16x512xf32>
    %7 = arith.maximumf %5, %6 : vector<16x512xf32>
    %c0_6 = arith.constant 0 : index
    %c0_7 = arith.constant 0 : index
    %8 = vector.load %arg4[%c0_6, %c0_7] : memref<512x512xf32, #tpu.memory_space<vmem>>, vector<512x512xf32>
    %cst_8 = arith.constant dense<0.000000e+00> : vector<16x512xf32>
    %9 = tpu.matmul %7, %8, %cst_8 {dimension_numbers = #tpu.dot_dimension_numbers<[1], [0], [0], [1], [0, 0, 1, 1], [], []>} : vector<16x512xf32>, vector<512x512xf32>, vector<16x512xf32> -> vector<16x512xf32>
    %c0_9 = arith.constant 0 : index
    %c0_10 = arith.constant 0 : index
    %10 = vector.load %arg5[%c0_9, %c0_10] : memref<1x512xf32, #tpu.memory_space<vmem>>, vector<1x512xf32>
    %11 = vector.broadcast %10 : vector<1x512xf32> to vector<16x512xf32>
    %12 = arith.addf %9, %11 : vector<16x512xf32>
    %cst_11 = arith.constant 0.000000e+00 : f32
    %13 = vector.broadcast %cst_11 : f32 to vector<16x512xf32>
    %14 = arith.maximumf %12, %13 : vector<16x512xf32>
    %c0_12 = arith.constant 0 : index
    %c0_13 = arith.constant 0 : index
    %15 = vector.load %arg6[%c0_12, %c0_13] : memref<512x128xf32, #tpu.memory_space<vmem>>, vector<512x128xf32>
    %cst_14 = arith.constant dense<0.000000e+00> : vector<16x128xf32>
    %16 = tpu.matmul %14, %15, %cst_14 {dimension_numbers = #tpu.dot_dimension_numbers<[1], [0], [0], [1], [0, 0, 1, 1], [], []>} : vector<16x512xf32>, vector<512x128xf32>, vector<16x128xf32> -> vector<16x128xf32>
    %c0_15 = arith.constant 0 : index
    %c0_16 = arith.constant 0 : index
    %17 = vector.load %arg7[%c0_15, %c0_16] : memref<1x128xf32, #tpu.memory_space<vmem>>, vector<1x128xf32>
    %18 = vector.broadcast %17 : vector<1x128xf32> to vector<16x128xf32>
    %19 = arith.addf %16, %18 : vector<16x128xf32>
    %c0_17 = arith.constant 0 : index
    %c0_18 = arith.constant 0 : index
    %20 = vector.load %arg8[%c0_17, %c0_18] : memref<16x128xf32, #tpu.memory_space<vmem>>, vector<16x128xf32>
    tpu.vector_store %arg8[%c0_17, %c0_18], %19 {strides = array<i32>} : memref<16x128xf32, #tpu.memory_space<vmem>>, vector<16x128xf32>,
    return
  }
  func.func @transform_0(%arg0: i32) -> (i32, i32) {
    %c0_i32 = arith.constant 0 : i32
    %c0_i32_0 = arith.constant 0 : i32
    return %arg0, %c0_i32 : i32, i32
  }
  func.func @transform_1(%arg0: i32) -> (i32, i32) {
    %c0_i32 = arith.constant 0 : i32
    %c0_i32_0 = arith.constant 0 : i32
    %c0_i32_1 = arith.constant 0 : i32
    return %c0_i32, %c0_i32_0 : i32, i32
  }
  func.func @transform_2(%arg0: i32) -> (i32, i32) {
    %c0_i32 = arith.constant 0 : i32
    %c0_i32_0 = arith.constant 0 : i32
    %c0_i32_1 = arith.constant 0 : i32
    return %c0_i32, %c0_i32_0 : i32, i32
  }
  func.func @transform_3(%arg0: i32) -> (i32, i32) {
    %c0_i32 = arith.constant 0 : i32
    %c0_i32_0 = arith.constant 0 : i32
    %c0_i32_1 = arith.constant 0 : i32
    return %c0_i32, %c0_i32_0 : i32, i32
  }
  func.func @transform_4(%arg0: i32) -> (i32, i32) {
    %c0_i32 = arith.constant 0 : i32
    %c0_i32_0 = arith.constant 0 : i32
    %c0_i32_1 = arith.constant 0 : i32
    return %c0_i32, %c0_i32_0 : i32, i32
  }
  func.func @transform_5(%arg0: i32) -> (i32, i32) {
    %c0_i32 = arith.constant 0 : i32
    %c0_i32_0 = arith.constant 0 : i32
    %c0_i32_1 = arith.constant 0 : i32
    return %c0_i32, %c0_i32_0 : i32, i32
  }
  func.func @transform_6(%arg0: i32) -> (i32, i32) {
    %c0_i32 = arith.constant 0 : i32
    %c0_i32_0 = arith.constant 0 : i32
    %c0_i32_1 = arith.constant 0 : i32
    return %c0_i32, %c0_i32_0 : i32, i32
  }
  func.func @transform_7(%arg0: i32) -> (i32, i32) {
    %c0_i32 = arith.constant 0 : i32
    %c0_i32_0 = arith.constant 0 : i32
    return %arg0, %c0_i32 : i32, i32
  }
}

</mosaic_0001>

<llo_original>
// kernel: tpu_custom_call.1
$region0: #{tpu_custom_call.1}
  #allocation0 [shape = 'u32[]', space=smem, size = 0x4, offset = 0x4, fixed_abs, tag = 'smem constant byte address 0x4 - core index']
  #allocation1 [shape = 'u32[144,128]{1,0:T(1,128)}', space=vmem, size = 0x12000, scoped, tag = 'internal scratch']
  %s0 = inlined_call_operand.hbm [shape: f32[64,256], index: 0, kind: input, shape index: {}]
  %s1 = inlined_call_operand.hbm [shape: f32[256,512], index: 1, kind: input, shape index: {}]
  %s2 = inlined_call_operand.hbm [shape: f32[1,512], index: 2, kind: input, shape index: {}]
  %s3 = inlined_call_operand.hbm [shape: f32[512,512], index: 3, kind: input, shape index: {}]
  %s4 = inlined_call_operand.vmem [shape: f32[1,512], index: 4, kind: input, shape index: {}]
  %s5 = inlined_call_operand.hbm [shape: f32[512,128], index: 5, kind: input, shape index: {}]
  %s6 = inlined_call_operand.vmem [shape: f32[1,128], index: 6, kind: input, shape index: {}]
  %s7 = inlined_call_operand.hbm [shape: f32[64,128], index: 7, kind: output, shape index: {}]
  %s8 = sld [smem:[#allocation0]]
  $region81: #{tpu_custom_call.1} parent=0
    _
  %s10 = ssub.s32 1, %s8
  %s11 = scalar_select 0, %s10, %s8
  $region1: #{tpu_custom_call.1} parent=0
    #allocation2 [shape = 'u8[32768]{0}', space=vmem, size = 0x8000, scoped, tag = 'input window, operand 0']
    #allocation3 [shape = 's32[2]{0}', space=sflag, size = 0x8, scoped, tag = 'scoped memory for tpu_custom_call.1']
    #allocation4 [shape = 's32[2]{0}', space=sflag, size = 0x8, scoped, tag = 'scoped memory for tpu_custom_call.1']
    #allocation5 [shape = 'u8[524288]{0}', space=vmem, size = 0x80000, scoped, tag = 'input window, operand 1, single buffered']
    #allocation6 [shape = 's32[1]{0}', space=sflag, size = 0x4, scoped, tag = 'scoped memory for tpu_custom_call.1']
    #allocation7 [shape = 'u8[2048]{0}', space=vmem, size = 0x800, scoped, tag = 'input window, operand 2, single buffered']
    #allocation8 [shape = 'u8[1048576]{0}', space=vmem, size = 0x100000, scoped, tag = 'input window, operand 3, single buffered']
    #allocation9 [shape = 's32[1]{0}', space=sflag, size = 0x4, scoped, tag = 'scoped memory for tpu_custom_call.1']
    #allocation10 [shape = 'u8[262144]{0}', space=vmem, size = 0x40000, scoped, tag = 'input window, operand 5, single buffered']
    #allocation11 [shape = 'u8[16384]{0}', space=vmem, size = 0x4000, scoped, tag = 'output window, operand 0']
    %12 = vsyncpa [#allocation3], 0
    %s13 = scalar_lea.sflag [#allocation3], 1
    %14 = vsyncpa %s13, 0
    %15 = vsyncpa [#allocation6], 0
    %16 = vsyncpa [#allocation9], 0
    %17 = vsyncpa [#allocation4], 0
    %s18 = scalar_lea.sflag [#allocation4], 1
    %19 = vsyncpa %s18, 0
    loop: start=0, step=1, limit=6
    $region2: #{tpu_custom_call.1} parent=1 // loop_pre_header
      _
    $region3: #{tpu_custom_call.1} parent=1 // loop_header
      %s21 = sphi 0, %s25
      %p22 = scmp.ge.s32.totalorder %s21, 6
      %s31 = sphi 0, %s33
      %s34 = sphi 0, %s31
      %s35 = sphi 0, %s34
      %s51 = sphi 0, %s35
      %s55 = sphi 0, %s55
      %s57 = sphi 0, %s55
      %s58 = sphi 0, %s57
      %s72 = sphi 0, %s58
      %s76 = sphi 0, %s76
      %s78 = sphi 0, %s76
      %s79 = sphi 0, %s78
      %s93 = sphi 0, %s79
      %s97 = sphi 0, %s97
      %s99 = sphi 0, %s97
      %s100 = sphi 0, %s99
      %s114 = sphi 0, %s100
      %s118 = sphi 0, %s118
      %s120 = sphi 0, %s118
      %s121 = sphi 0, %s120
      %s135 = sphi 0, %s121
      %s139 = sphi 0, %s139
      %s141 = sphi 0, %s139
      %s142 = sphi 0, %s141
      %s156 = sphi 0, %s142
      %s160 = sphi 0, %s160
      %s162 = sphi 0, %s160
      %s163 = sphi 0, %s162
      %s177 = sphi 0, %s163
      %s183 = sphi 0, %s185
      %s186 = sphi 0, %s183
      %s187 = sphi 0, %s186
      %s203 = sphi 0, %s187
    $region4: #{tpu_custom_call.1} parent=1 // loop_header_branch
      %24 = sbr.rel (%p22) target = $region8
    $region5: #{tpu_custom_call.1} parent=1 // loop_body
      %s26 = ssub.s32 %s21, 1
      %s27 = ssub.s32 %s21, 2
      %s28 = sadd.s32 %s21, 1
      %s29 = ssub.s32 %s21, %s28
      %p30 = scmp.eq.s32.totalorder %s29, 0
      %s32 = sadd.s32 %s31, 1
      %s33 = scalar_select %p30, %s31, %s32
      %p36 = pneg %p30
      %p37 = scmp.eq.s32.totalorder %s21, 3
      %p38 = por %p36, %p37
      %p39 = scmp.ne.s32.totalorder %s31, %s34
      %p40 = scmp.eq.s32.totalorder %s21, 0
      %p41 = por %p39, %p40
      %p42 = scmp.ne.s32.totalorder %s31, %s34
      %p43 = scmp.eq.s32.totalorder %s26, 3
      %p44 = por %p42, %p43
      %p45 = scmp.ne.s32.totalorder %s34, %s35
      %p46 = scmp.eq.s32.totalorder %s26, 0
      %p47 = por %p45, %p46
      %p48 = scmp.ne.s32.totalorder %s34, %s35
      %p49 = scmp.eq.s32.totalorder %s27, 3
      %p50 = por %p48, %p49
      %p52 = scmp.ne.s32.totalorder %s35, %s51
      %p53 = scmp.eq.s32.totalorder %s27, 0
      %p54 = por %p52, %p53
      %s56 = sadd.s32 %s55, 1
      %p59 = scmp.eq.s32.totalorder %s21, 3
      %p60 = scmp.ne.s32.totalorder %s55, %s57
      %p61 = scmp.eq.s32.totalorder %s21, 0
      %p62 = por %p60, %p61
      %p63 = scmp.ne.s32.totalorder %s55, %s57
      %p64 = scmp.eq.s32.totalorder %s26, 3
      %p65 = por %p63, %p64
      %p66 = scmp.ne.s32.totalorder %s57, %s58
      %p67 = scmp.eq.s32.totalorder %s26, 0
      %p68 = por %p66, %p67
      %p69 = scmp.ne.s32.totalorder %s57, %s58
      %p70 = scmp.eq.s32.totalorder %s27, 3
      %p71 = por %p69, %p70
      %p73 = scmp.ne.s32.totalorder %s58, %s72
      %p74 = scmp.eq.s32.totalorder %s27, 0
      %p75 = por %p73, %p74
      %s77 = sadd.s32 %s76, 1
      %p80 = scmp.eq.s32.totalorder %s21, 3
      %p81 = scmp.ne.s32.totalorder %s76, %s78
      %p82 = scmp.eq.s32.totalorder %s21, 0
      %p83 = por %p81, %p82
      %p84 = scmp.ne.s32.totalorder %s76, %s78
      %p85 = scmp.eq.s32.totalorder %s26, 3
      %p86 = por %p84, %p85
      %p87 = scmp.ne.s32.totalorder %s78, %s79
      %p88 = scmp.eq.s32.totalorder %s26, 0
      %p89 = por %p87, %p88
      %p90 = scmp.ne.s32.totalorder %s78, %s79
      %p91 = scmp.eq.s32.totalorder %s27, 3
      %p92 = por %p90, %p91
      %p94 = scmp.ne.s32.totalorder %s79, %s93
      %p95 = scmp.eq.s32.totalorder %s27, 0
      %p96 = por %p94, %p95
      %s98 = sadd.s32 %s97, 1
      %p101 = scmp.eq.s32.totalorder %s21, 3
      %p102 = scmp.ne.s32.totalorder %s97, %s99
      %p103 = scmp.eq.s32.totalorder %s21, 0
      %p104 = por %p102, %p103
      %p105 = scmp.ne.s32.totalorder %s97, %s99
      %p106 = scmp.eq.s32.totalorder %s26, 3
      %p107 = por %p105, %p106
      %p108 = scmp.ne.s32.totalorder %s99, %s100
      %p109 = scmp.eq.s32.totalorder %s26, 0
      %p110 = por %p108, %p109
      %p111 = scmp.ne.s32.totalorder %s99, %s100
      %p112 = scmp.eq.s32.totalorder %s27, 3
      %p113 = por %p111, %p112
      %p115 = scmp.ne.s32.totalorder %s100, %s114
      %p116 = scmp.eq.s32.totalorder %s27, 0
      %p117 = por %p115, %p116
      %s119 = sadd.s32 %s118, 1
      %p122 = scmp.eq.s32.totalorder %s21, 3
      %p123 = scmp.ne.s32.totalorder %s118, %s120
      %p124 = scmp.eq.s32.totalorder %s21, 0
      %p125 = por %p123, %p124
      %p126 = scmp.ne.s32.totalorder %s118, %s120
      %p127 = scmp.eq.s32.totalorder %s26, 3
      %p128 = por %p126, %p127
      %p129 = scmp.ne.s32.totalorder %s120, %s121
      %p130 = scmp.eq.s32.totalorder %s26, 0
      %p131 = por %p129, %p130
      %p132 = scmp.ne.s32.totalorder %s120, %s121
      %p133 = scmp.eq.s32.totalorder %s27, 3
      %p134 = por %p132, %p133
      %p136 = scmp.ne.s32.totalorder %s121, %s135
      %p137 = scmp.eq.s32.totalorder %s27, 0
      %p138 = por %p136, %p137
      %s140 = sadd.s32 %s139, 1
      %p143 = scmp.eq.s32.totalorder %s21, 3
      %p144 = scmp.ne.s32.totalorder %s139, %s141
      %p145 = scmp.eq.s32.totalorder %s21, 0
      %p146 = por %p144, %p145
      %p147 = scmp.ne.s32.totalorder %s139, %s141
      %p148 = scmp.eq.s32.totalorder %s26, 3
      %p149 = por %p147, %p148
      %p150 = scmp.ne.s32.totalorder %s141, %s142
      %p151 = scmp.eq.s32.totalorder %s26, 0
      %p152 = por %p150, %p151
      %p153 = scmp.ne.s32.totalorder %s141, %s142
      %p154 = scmp.eq.s32.totalorder %s27, 3
      %p155 = por %p153, %p154
      %p157 = scmp.ne.s32.totalorder %s142, %s156
      %p158 = scmp.eq.s32.totalorder %s27, 0
      %p159 = por %p157, %p158
      %s161 = sadd.s32 %s160, 1
      %p164 = scmp.eq.s32.totalorder %s21, 3
      %p165 = scmp.ne.s32.totalorder %s160, %s162
      %p166 = scmp.eq.s32.totalorder %s21, 0
      %p167 = por %p165, %p166
      %p168 = scmp.ne.s32.totalorder %s160, %s162
      %p169 = scmp.eq.s32.totalorder %s26, 3
      %p170 = por %p168, %p169
      %p171 = scmp.ne.s32.totalorder %s162, %s163
      %p172 = scmp.eq.s32.totalorder %s26, 0
      %p173 = por %p171, %p172
      %p174 = scmp.ne.s32.totalorder %s162, %s163
      %p175 = scmp.eq.s32.totalorder %s27, 3
      %p176 = por %p174, %p175
      %p178 = scmp.ne.s32.totalorder %s163, %s177
      %p179 = scmp.eq.s32.totalorder %s27, 0
      %p180 = por %p178, %p179
      %s181 = ssub.s32 %s21, %s28
      %p182 = scmp.eq.s32.totalorder %s181, 0
      %s184 = sadd.s32 %s183, 1
      %s185 = scalar_select %p182, %s183, %s184
      %p188 = pneg %p182
      %p189 = scmp.eq.s32.totalorder %s21, 3
      %p190 = por %p188, %p189
      %p191 = scmp.ne.s32.totalorder %s183, %s186
      %p192 = scmp.eq.s32.totalorder %s21, 0
      %p193 = por %p191, %p192
      %p194 = scmp.ne.s32.totalorder %s183, %s186
      %p195 = scmp.eq.s32.totalorder %s26, 3
      %p196 = por %p194, %p195
      %p197 = scmp.ne.s32.totalorder %s186, %s187
      %p198 = scmp.eq.s32.totalorder %s26, 0
      %p199 = por %p197, %p198
      %p200 = scmp.ne.s32.totalorder %s186, %s187
      %p201 = scmp.eq.s32.totalorder %s27, 3
      %p202 = por %p200, %p201
      %p204 = scmp.ne.s32.totalorder %s187, %s203
      %p205 = scmp.eq.s32.totalorder %s27, 0
      %p206 = por %p204, %p205
      %p207 = scmp.le.s32.totalorder 1, %s21
      %p208 = scmp.lt.s32.totalorder %s21, 5
      %p209 = pnand %p207, %p208
      %p210 = pneg %p209
      // Predicated region
      $region9: #{tpu_custom_call.1} parent=5 // pred_check
        _
      $region10: #{tpu_custom_call.1} parent=5 // pred_check_branch
        %212 = sbr.rel (%p209) target = $region12
      $region11: #{tpu_custom_call.1} parent=5 // pred_region
        %s213 = ssub.s32 %s21, 1
        // Predicated region
        $region13: #{tpu_custom_call.1} parent=11 // pred_check
          %p214 = pneg %p68
        $region14: #{tpu_custom_call.1} parent=11 // pred_check_branch
          %216 = sbr.rel (%p214) target = $region16
        $region15: #{tpu_custom_call.1} parent=11 // pred_region
          %s218 = ssub.s32 16384, 16384
          %219 = vsyncadd [#allocation6], %s218
          %s220 = sshll.u32 [#allocation5], 4
          %s221 = int_to_ptr.vmem [resolvable:$true] %s220
          %226 = dma.hbm_to_vmem [thread:$0]  %s1, 16384, %s221, [#allocation6], 512, 512, 32
        $region16: #{tpu_custom_call.1} parent=11 // pred_fallthru
          _
        // Predicated region
        $region17: #{tpu_custom_call.1} parent=11 // pred_check
          %p227 = pneg %p89
        $region18: #{tpu_custom_call.1} parent=11 // pred_check_branch
          %229 = sbr.rel (%p227) target = $region20
        $region19: #{tpu_custom_call.1} parent=11 // pred_region
          %s231 = ssub.s32 64, 64
          %232 = vsyncadd [#allocation6], %s231
          %s234 = sshll.u32 [#allocation7], 4
          %s235 = int_to_ptr.vmem [resolvable:$true] %s234
          %237 = dma.hbm_to_vmem [thread:$0]  %s2, 64, %s235, [#allocation6]
        $region20: #{tpu_custom_call.1} parent=11 // pred_fallthru
          _
        // Predicated region
        $region21: #{tpu_custom_call.1} parent=11 // pred_check
          %p238 = pneg %p110
        $region22: #{tpu_custom_call.1} parent=11 // pred_check_branch
          %240 = sbr.rel (%p238) target = $region24
        $region23: #{tpu_custom_call.1} parent=11 // pred_region
          %s242 = ssub.s32 32768, 32768
          %243 = vsyncadd [#allocation9], %s242
          %s244 = sshll.u32 [#allocation8], 4
          %s245 = int_to_ptr.vmem [resolvable:$true] %s244
          %250 = dma.hbm_to_vmem [thread:$0]  %s3, 32768, %s245, [#allocation9], 512, 512, 32
        $region24: #{tpu_custom_call.1} parent=11 // pred_fallthru
          _
        // Predicated region
        $region25: #{tpu_custom_call.1} parent=11 // pred_check
          %p251 = pneg %p131
        $region26: #{tpu_custom_call.1} parent=11 // pred_check_branch
          %253 = sbr.rel (%p251) target = $region28
        $region27: #{tpu_custom_call.1} parent=11 // pred_region
          _
        $region28: #{tpu_custom_call.1} parent=11 // pred_fallthru
          _
        // Predicated region
        $region29: #{tpu_custom_call.1} parent=11 // pred_check
          %p254 = pneg %p152
        $region30: #{tpu_custom_call.1} parent=11 // pred_check_branch
          %256 = sbr.rel (%p254) target = $region32
        $region31: #{tpu_custom_call.1} parent=11 // pred_region
          %s258 = ssub.s32 8192, 8192
          %259 = vsyncadd [#allocation9], %s258
          %s260 = sshll.u32 [#allocation10], 4
          %s261 = int_to_ptr.vmem [resolvable:$true] %s260
          %266 = dma.hbm_to_vmem [thread:$0]  %s5, 8192, %s261, [#allocation9], 128, 128, 8
        $region32: #{tpu_custom_call.1} parent=11 // pred_fallthru
          _
        // Predicated region
        $region33: #{tpu_custom_call.1} parent=11 // pred_check
          %p267 = pneg %p173
        $region34: #{tpu_custom_call.1} parent=11 // pred_check_branch
          %269 = sbr.rel (%p267) target = $region36
        $region35: #{tpu_custom_call.1} parent=11 // pred_region
          _
        $region36: #{tpu_custom_call.1} parent=11 // pred_fallthru
          _
      $region12: #{tpu_custom_call.1} parent=5 // pred_fallthru
        _
      %p270 = scmp.lt.s32.totalorder %s21, 4
      // Predicated region
      $region37: #{tpu_custom_call.1} parent=5 // pred_check
        %p271 = pneg %p270
      $region38: #{tpu_custom_call.1} parent=5 // pred_check_branch
        %273 = sbr.rel (%p271) target = $region40
      $region39: #{tpu_custom_call.1} parent=5 // pred_region
        // Predicated region
        $region41: #{tpu_custom_call.1} parent=39 // pred_check
          %p274 = pneg %p41
        $region42: #{tpu_custom_call.1} parent=39 // pred_check_branch
          %276 = sbr.rel (%p274) target = $region44
        $region43: #{tpu_custom_call.1} parent=39 // pred_region
          %s277 = sand.u32 %s31, 1
          %s278 = scalar_lea.sflag [#allocation3], %s277
          %s279 = sand.u32 %s31, 1
          %s280 = smul.addr %s279, 32
          %s281 = scalar_lea.vmem [#allocation2], %s280
          %s282 = smul.u32 2, %s21
          %s284 = ssub.s32 512, 512
          %285 = vsyncadd %s278, %s284
          %s286 = smul.addr %s282, 2
          %s287 = smul.addr %s286, 128
          %s288 = scalar_lea.hbm %s0, %s287
          %s289 = sshll.u32 %s281, 4
          %s290 = int_to_ptr.vmem [resolvable:$true] %s289
          %295 = dma.hbm_to_vmem [thread:$0]  %s288, 512, %s290, %s278, 256, 256, 16
        $region44: #{tpu_custom_call.1} parent=39 // pred_fallthru
          _
      $region40: #{tpu_custom_call.1} parent=5 // pred_fallthru
        _
      %p296 = scmp.le.s32.totalorder 1, %s21
      %p297 = scmp.lt.s32.totalorder %s21, 5
      %p298 = pnand %p296, %p297
      %p299 = pneg %p298
      // Predicated region
      $region45: #{tpu_custom_call.1} parent=5 // pred_check
        _
      $region46: #{tpu_custom_call.1} parent=5 // pred_check_branch
        %301 = sbr.rel (%p298) target = $region48
      $region47: #{tpu_custom_call.1} parent=5 // pred_region
        %s302 = ssub.s32 %s21, 1
        %s303 = sand.u32 %s34, 1
        %s304 = scalar_lea.sflag [#allocation3], %s303
        %s305 = sand.u32 %s34, 1
        %s306 = smul.addr %s305, 32
        %s307 = scalar_lea.vmem [#allocation2], %s306
        // Predicated region
        $region49: #{tpu_custom_call.1} parent=47 // pred_check
          %p308 = pneg %p47
        $region50: #{tpu_custom_call.1} parent=47 // pred_check_branch
          %310 = sbr.rel (%p308) target = $region52
        $region51: #{tpu_custom_call.1} parent=47 // pred_region
          %311 = dma.done %s304, 512
        $region52: #{tpu_custom_call.1} parent=47 // pred_fallthru
          _
        // Predicated region
        $region53: #{tpu_custom_call.1} parent=47 // pred_check
          %p312 = pneg %p68
        $region54: #{tpu_custom_call.1} parent=47 // pred_check_branch
          %314 = sbr.rel (%p312) target = $region56
        $region55: #{tpu_custom_call.1} parent=47 // pred_region
          %315 = dma.done [#allocation6], 16384
        $region56: #{tpu_custom_call.1} parent=47 // pred_fallthru
          _
        // Predicated region
        $region57: #{tpu_custom_call.1} parent=47 // pred_check
          %p316 = pneg %p89
        $region58: #{tpu_custom_call.1} parent=47 // pred_check_branch
          %318 = sbr.rel (%p316) target = $region60
        $region59: #{tpu_custom_call.1} parent=47 // pred_region
          %319 = dma.done [#allocation6], 64
        $region60: #{tpu_custom_call.1} parent=47 // pred_fallthru
          _
        // Predicated region
        $region61: #{tpu_custom_call.1} parent=47 // pred_check
          %p320 = pneg %p110
        $region62: #{tpu_custom_call.1} parent=47 // pred_check_branch
          %322 = sbr.rel (%p320) target = $region64
        $region63: #{tpu_custom_call.1} parent=47 // pred_region
          %323 = dma.done [#allocation9], 32768
        $region64: #{tpu_custom_call.1} parent=47 // pred_fallthru
          _
        // Predicated region
        $region65: #{tpu_custom_call.1} parent=47 // pred_check
          %p324 = pneg %p152
        $region66: #{tpu_custom_call.1} parent=47 // pred_check_branch
          %326 = sbr.rel (%p324) target = $region68
        $region67: #{tpu_custom_call.1} parent=47 // pred_region
          %327 = dma.done [#allocation9], 8192
        $region68: #{tpu_custom_call.1} parent=47 // pred_fallthru
          _
        %s328 = sand.u32 %s34, 1
        %s329 = scalar_lea.sflag [#allocation3], %s328
        %s330 = sand.u32 %s34, 1
        %s331 = smul.addr %s330, 32
        %s332 = scalar_lea.vmem [#allocation2], %s331
        %p333 = pneg %p47
        %p334 = pneg %p44
        %p335 = pneg %p68
        %p336 = pneg %p65
        %p337 = pneg %p89
        %p338 = pneg %p86
        %p339 = pneg %p110
        %p340 = pneg %p107
        %p341 = pneg %p131
        %p342 = pneg %p128
        %p343 = pneg %p152
        %p344 = pneg %p149
        %p345 = pneg %p173
        %p346 = pneg %p170
        %p347 = pneg %p199
        %p348 = pneg %p196
        %s349 = sand.u32 %s186, 1
        %s350 = scalar_lea.sflag [#allocation4], %s349
        %s351 = sand.u32 %s186, 1
        %s352 = smul.addr %s351, 16
        %s353 = scalar_lea.vmem [#allocation11], %s352
        %s354 = smul.u32 2, %s26
        %s355 = smul.u32 2, %s26
        %v356 = vld [vmem:[%s307] sm:$0xff]
        %v357 = vld [vmem:[%s307 + $0x8] sm:$0xff]
        %v358 = vld [vmem:[%s307 + $0x10] sm:$0xff]
        %v359 = vld [vmem:[%s307 + $0x18] sm:$0xff]
        %v360 = vld [vmem:[#allocation5] sm:$0xff]
        %v361 = vld [vmem:[#allocation5 + $0x8] sm:$0xff]
        %v362 = vld [vmem:[#allocation5 + $0x10] sm:$0xff]
        %v363 = vld [vmem:[#allocation5 + $0x18] sm:$0xff]
        %v364 = vld [vmem:[#allocation5 + $0x20] sm:$0xff]
        %v365 = vld [vmem:[#allocation5 + $0x28] sm:$0xff]
        %v366 = vld [vmem:[#allocation5 + $0x30] sm:$0xff]
        %v367 = vld [vmem:[#allocation5 + $0x38] sm:$0xff]
        %v368 = vld [vmem:[#allocation5 + $0x40] sm:$0xff]
        %v369 = vld [vmem:[#allocation5 + $0x48] sm:$0xff]
        %v370 = vld [vmem:[#allocation5 + $0x50] sm:$0xff]
        %v371 = vld [vmem:[#allocation5 + $0x58] sm:$0xff]
        %v372 = vld [vmem:[#allocation5 + $0x60] sm:$0xff]
        %v373 = vld [vmem:[#allocation5 + $0x68] sm:$0xff]
        %v374 = vld [vmem:[#allocation5 + $0x70] sm:$0xff]
        %v375 = vld [vmem:[#allocation5 + $0x78] sm:$0xff]
        %v376 = vld [vmem:[#allocation5 + $0x80] sm:$0xff]
        %v377 = vld [vmem:[#allocation5 + $0x88] sm:$0xff]
        %v378 = vld [vmem:[#allocation5 + $0x90] sm:$0xff]
        %v379 = vld [vmem:[#allocation5 + $0x98] sm:$0xff]
        %v380 = vld [vmem:[#allocation5 + $0xa0] sm:$0xff]
        %v381 = vld [vmem:[#allocation5 + $0xa8] sm:$0xff]
        %v382 = vld [vmem:[#allocation5 + $0xb0] sm:$0xff]
        %v383 = vld [vmem:[#allocation5 + $0xb8] sm:$0xff]
        %v384 = vld [vmem:[#allocation5 + $0xc0] sm:$0xff]
        %v385 = vld [vmem:[#allocation5 + $0xc8] sm:$0xff]
        %v386 = vld [vmem:[#allocation5 + $0xd0] sm:$0xff]
        %v387 = vld [vmem:[#allocation5 + $0xd8] sm:$0xff]
        %v388 = vld [vmem:[#allocation5 + $0xe0] sm:$0xff]
        %v389 = vld [vmem:[#allocation5 + $0xe8] sm:$0xff]
        %v390 = vld [vmem:[#allocation5 + $0xf0] sm:$0xff]
        %v391 = vld [vmem:[#allocation5 + $0xf8] sm:$0xff]
        %v392 = vld [vmem:[#allocation5 + $0x100] sm:$0xff]
        %v393 = vld [vmem:[#allocation5 + $0x108] sm:$0xff]
        %v394 = vld [vmem:[#allocation5 + $0x110] sm:$0xff]
        %v395 = vld [vmem:[#allocation5 + $0x118] sm:$0xff]
        %v396 = vld [vmem:[#allocation5 + $0x120] sm:$0xff]
        %v397 = vld [vmem:[#allocation5 + $0x128] sm:$0xff]
        %v398 = vld [vmem:[#allocation5 + $0x130] sm:$0xff]
        %v399 = vld [vmem:[#allocation5 + $0x138] sm:$0xff]
        %v400 = vld [vmem:[#allocation5 + $0x140] sm:$0xff]
        %v401 = vld [vmem:[#allocation5 + $0x148] sm:$0xff]
        %v402 = vld [vmem:[#allocation5 + $0x150] sm:$0xff]
        %v403 = vld [vmem:[#allocation5 + $0x158] sm:$0xff]
        %v404 = vld [vmem:[#allocation5 + $0x160] sm:$0xff]
        %v405 = vld [vmem:[#allocation5 + $0x168] sm:$0xff]
        %v406 = vld [vmem:[#allocation5 + $0x170] sm:$0xff]
        %v407 = vld [vmem:[#allocation5 + $0x178] sm:$0xff]
        %v408 = vld [vmem:[#allocation5 + $0x180] sm:$0xff]
        %v409 = vld [vmem:[#allocation5 + $0x188] sm:$0xff]
        %v410 = vld [vmem:[#allocation5 + $0x190] sm:$0xff]
        %v411 = vld [vmem:[#allocation5 + $0x198] sm:$0xff]
        %v412 = vld [vmem:[#allocation5 + $0x1a0] sm:$0xff]
        %v413 = vld [vmem:[#allocation5 + $0x1a8] sm:$0xff]
        %v414 = vld [vmem:[#allocation5 + $0x1b0] sm:$0xff]
        %v415 = vld [vmem:[#allocation5 + $0x1b8] sm:$0xff]
        %v416 = vld [vmem:[#allocation5 + $0x1c0] sm:$0xff]
        %v417 = vld [vmem:[#allocation5 + $0x1c8] sm:$0xff]
        %v418 = vld [vmem:[#allocation5 + $0x1d0] sm:$0xff]
        %v419 = vld [vmem:[#allocation5 + $0x1d8] sm:$0xff]
        %v420 = vld [vmem:[#allocation5 + $0x1e0] sm:$0xff]
        %v421 = vld [vmem:[#allocation5 + $0x1e8] sm:$0xff]
        %v422 = vld [vmem:[#allocation5 + $0x1f0] sm:$0xff]
        %v423 = vld [vmem:[#allocation5 + $0x1f8] sm:$0xff]
        %v424 = vld [vmem:[#allocation5 + $0x200] sm:$0xff]
        %v425 = vld [vmem:[#allocation5 + $0x208] sm:$0xff]
        %v426 = vld [vmem:[#allocation5 + $0x210] sm:$0xff]
        %v427 = vld [vmem:[#allocation5 + $0x218] sm:$0xff]
        %v428 = vld [vmem:[#allocation5 + $0x220] sm:$0xff]
        %v429 = vld [vmem:[#allocation5 + $0x228] sm:$0xff]
        %v430 = vld [vmem:[#allocation5 + $0x230] sm:$0xff]
        %v431 = vld [vmem:[#allocation5 + $0x238] sm:$0xff]
        %v432 = vld [vmem:[#allocation5 + $0x240] sm:$0xff]
        %v433 = vld [vmem:[#allocation5 + $0x248] sm:$0xff]
        %v434 = vld [vmem:[#allocation5 + $0x250] sm:$0xff]
        %v435 = vld [vmem:[#allocation5 + $0x258] sm:$0xff]
        %v436 = vld [vmem:[#allocation5 + $0x260] sm:$0xff]
        %v437 = vld [vmem:[#allocation5 + $0x268] sm:$0xff]
        %v438 = vld [vmem:[#allocation5 + $0x270] sm:$0xff]
        %v439 = vld [vmem:[#allocation5 + $0x278] sm:$0xff]
        %v440 = vld [vmem:[#allocation5 + $0x280] sm:$0xff]
        %v441 = vld [vmem:[#allocation5 + $0x288] sm:$0xff]
        %v442 = vld [vmem:[#allocation5 + $0x290] sm:$0xff]
        %v443 = vld [vmem:[#allocation5 + $0x298] sm:$0xff]
        %v444 = vld [vmem:[#allocation5 + $0x2a0] sm:$0xff]
        %v445 = vld [vmem:[#allocation5 + $0x2a8] sm:$0xff]
        %v446 = vld [vmem:[#allocation5 + $0x2b0] sm:$0xff]
        %v447 = vld [vmem:[#allocation5 + $0x2b8] sm:$0xff]
        %v448 = vld [vmem:[#allocation5 + $0x2c0] sm:$0xff]
        %v449 = vld [vmem:[#allocation5 + $0x2c8] sm:$0xff]
        %v450 = vld [vmem:[#allocation5 + $0x2d0] sm:$0xff]
        %v451 = vld [vmem:[#allocation5 + $0x2d8] sm:$0xff]
        %v452 = vld [vmem:[#allocation5 + $0x2e0] sm:$0xff]
        %v453 = vld [vmem:[#allocation5 + $0x2e8] sm:$0xff]
        %v454 = vld [vmem:[#allocation5 + $0x2f0] sm:$0xff]
        %v455 = vld [vmem:[#allocation5 + $0x2f8] sm:$0xff]
        %v456 = vld [vmem:[#allocation5 + $0x300] sm:$0xff]
        %v457 = vld [vmem:[#allocation5 + $0x308] sm:$0xff]
        %v458 = vld [vmem:[#allocation5 + $0x310] sm:$0xff]
        %v459 = vld [vmem:[#allocation5 + $0x318] sm:$0xff]
        %v460 = vld [vmem:[#allocation5 + $0x320] sm:$0xff]
        %v461 = vld [vmem:[#allocation5 + $0x328] sm:$0xff]
        %v462 = vld [vmem:[#allocation5 + $0x330] sm:$0xff]
        %v463 = vld [vmem:[#allocation5 + $0x338] sm:$0xff]
        %v464 = vld [vmem:[#allocation5 + $0x340] sm:$0xff]
        %v465 = vld [vmem:[#allocation5 + $0x348] sm:$0xff]
        %v466 = vld [vmem:[#allocation5 + $0x350] sm:$0xff]
        %v467 = vld [vmem:[#allocation5 + $0x358] sm:$0xff]
        %v468 = vld [vmem:[#allocation5 + $0x360] sm:$0xff]
        %v469 = vld [vmem:[#allocation5 + $0x368] sm:$0xff]
        %v470 = vld [vmem:[#allocation5 + $0x370] sm:$0xff]
        %v471 = vld [vmem:[#allocation5 + $0x378] sm:$0xff]
        %v472 = vld [vmem:[#allocation5 + $0x380] sm:$0xff]
        %v473 = vld [vmem:[#allocation5 + $0x388] sm:$0xff]
        %v474 = vld [vmem:[#allocation5 + $0x390] sm:$0xff]
        %v475 = vld [vmem:[#allocation5 + $0x398] sm:$0xff]
        %v476 = vld [vmem:[#allocation5 + $0x3a0] sm:$0xff]
        %v477 = vld [vmem:[#allocation5 + $0x3a8] sm:$0xff]
        %v478 = vld [vmem:[#allocation5 + $0x3b0] sm:$0xff]
        %v479 = vld [vmem:[#allocation5 + $0x3b8] sm:$0xff]
        %v480 = vld [vmem:[#allocation5 + $0x3c0] sm:$0xff]
        %v481 = vld [vmem:[#allocation5 + $0x3c8] sm:$0xff]
        %v482 = vld [vmem:[#allocation5 + $0x3d0] sm:$0xff]
        %v483 = vld [vmem:[#allocation5 + $0x3d8] sm:$0xff]
        %v484 = vld [vmem:[#allocation5 + $0x3e0] sm:$0xff]
        %v485 = vld [vmem:[#allocation5 + $0x3e8] sm:$0xff]
        %v486 = vld [vmem:[#allocation5 + $0x3f0] sm:$0xff]
        %v487 = vld [vmem:[#allocation5 + $0x3f8] sm:$0xff]
        %v488 = vld [vmem:[#allocation7] sm:$0xf]
        %v490 = vlaneseq
        %v491 = vshrl.u32 %v490, 7
        %v492 = vsub.s32 0, %v491
        %v493 = vrot.slane %v488, %v492
        %v494 = vlaneseq
        %v495 = vshrl.u32 %v494, 7
        %v496 = vsub.s32 1, %v495
        %v497 = vrot.slane %v488, %v496
        %v498 = vlaneseq
        %v499 = vshrl.u32 %v498, 7
        %v500 = vsub.s32 2, %v499
        %v501 = vrot.slane %v488, %v500
        %v502 = vlaneseq
        %v503 = vshrl.u32 %v502, 7
        %v504 = vsub.s32 3, %v503
        %v505 = vrot.slane %v488, %v504
        %510 = vmatprep.subr.mxu0 %v421
        %511 = vmatpush1.msra.mxu0 %v420
        %512 = vmatprep.subr.mxu0 %v417
        %513 = vmatpush1.msra.mxu0 %v416
        %514 = vmatprep.subr.mxu0 %v413
        %515 = vmatpush1.msra.mxu0 %v412
        %516 = vmatprep.subr.mxu0 %v409
        %517 = vmatpush1.msra.mxu0 %v408
        %518 = vmatprep.subr.mxu0 %v405
        %519 = vmatpush1.msra.mxu0 %v404
        %520 = vmatprep.subr.mxu0 %v401
        %521 = vmatpush1.msra.mxu0 %v400
        %522 = vmatprep.subr.mxu0 %v397
        %523 = vmatpush1.msra.mxu0 %v396
        %524 = vmatprep.subr.mxu0 %v393
        %525 = vmatpush1.msra.mxu0 %v392
        %526 = vmatprep.subr.mxu0 %v389
        %527 = vmatpush1.msra.mxu0 %v388
        %528 = vmatprep.subr.mxu0 %v385
        %529 = vmatpush1.msra.mxu0 %v384
        %530 = vmatprep.subr.mxu0 %v381
        %531 = vmatpush1.msra.mxu0 %v380
        %532 = vmatprep.subr.mxu0 %v377
        %533 = vmatpush1.msra.mxu0 %v376
        %534 = vmatprep.subr.mxu0 %v373
        %535 = vmatpush1.msra.mxu0 %v372
        %536 = vmatprep.subr.mxu0 %v369
        %537 = vmatpush1.msra.mxu0 %v368
        %538 = vmatprep.subr.mxu0 %v365
        %539 = vmatpush1.msra.mxu0 %v364
        %540 = vmatprep.subr.mxu0 %v361
        %541 = vmatpush1.msra.mxu0 %v360
        %542 = vmatprep.subr.mxu0 %v485
        %543 = vmatpush2.msra.mxu0 %v484
        %544 = vmatprep.subr.mxu0 %v481
        %545 = vmatpush2.msra.mxu0 %v480
        %546 = vmatprep.subr.mxu0 %v477
        %547 = vmatpush2.msra.mxu0 %v476
        %548 = vmatprep.subr.mxu0 %v473
        %549 = vmatpush2.msra.mxu0 %v472
        %550 = vmatprep.subr.mxu0 %v469
        %551 = vmatpush2.msra.mxu0 %v468
        %552 = vmatprep.subr.mxu0 %v465
        %553 = vmatpush2.msra.mxu0 %v464
        %554 = vmatprep.subr.mxu0 %v461
        %555 = vmatpush2.msra.mxu0 %v460
        %556 = vmatprep.subr.mxu0 %v457
        %557 = vmatpush2.msra.mxu0 %v456
        %558 = vmatprep.subr.mxu0 %v453
        %559 = vmatpush2.msra.mxu0 %v452
        %560 = vmatprep.subr.mxu0 %v449
        %561 = vmatpush2.msra.mxu0 %v448
        %562 = vmatprep.subr.mxu0 %v445
        %563 = vmatpush2.msra.mxu0 %v444
        %564 = vmatprep.subr.mxu0 %v441
        %565 = vmatpush2.msra.mxu0 %v440
        %566 = vmatprep.subr.mxu0 %v437
        %567 = vmatpush2.msra.mxu0 %v436
        %568 = vmatprep.subr.mxu0 %v433
        %569 = vmatpush2.msra.mxu0 %v432
        %570 = vmatprep.subr.mxu0 %v429
        %571 = vmatpush2.msra.mxu0 %v428
        %572 = vmatprep.subr.mxu0 %v425
        %573 = vmatpush2.msra.mxu0 %v424
        %574 = vmatprep.mubr.f32.mxu0 %v357
        %575 = vmatmul.mubr.f32.gmra.mxu0 %v356
        %v576 = vpop.f32.mrf.mxu0
        %v577 = vadd.f32 %v493, %v576
        %v578 = vpop.f32.mrf.mxu0
        %v579 = vadd.f32 %v497, %v578
        %580 = vmatprep.mubr.f32.mxu0 %v359
        %581 = vmatmul.mubr.f32.gmra.mxu0 %v358
        %v582 = vpop.f32.mrf.mxu0
        %v583 = vadd.f32 %v493, %v582
        %v584 = vpop.f32.mrf.mxu0
        %v585 = vadd.f32 %v497, %v584
        %586 = vdwg.mxu0
        %587 = vmatprep.subr.mxu0 %v423
        %588 = vmatpush1.msra.mxu0 %v422
        %589 = vmatprep.subr.mxu0 %v419
        %590 = vmatpush1.msra.mxu0 %v418
        %591 = vmatprep.subr.mxu0 %v415
        %592 = vmatpush1.msra.mxu0 %v414
        %593 = vmatprep.subr.mxu0 %v411
        %594 = vmatpush1.msra.mxu0 %v410
        %595 = vmatprep.subr.mxu0 %v407
        %596 = vmatpush1.msra.mxu0 %v406
        %597 = vmatprep.subr.mxu0 %v403
        %598 = vmatpush1.msra.mxu0 %v402
        %599 = vmatprep.subr.mxu0 %v399
        %600 = vmatpush1.msra.mxu0 %v398
        %601 = vmatprep.subr.mxu0 %v395
        %602 = vmatpush1.msra.mxu0 %v394
        %603 = vmatprep.subr.mxu0 %v391
        %604 = vmatpush1.msra.mxu0 %v390
        %605 = vmatprep.subr.mxu0 %v387
        %606 = vmatpush1.msra.mxu0 %v386
        %607 = vmatprep.subr.mxu0 %v383
        %608 = vmatpush1.msra.mxu0 %v382
        %609 = vmatprep.subr.mxu0 %v379
        %610 = vmatpush1.msra.mxu0 %v378
        %611 = vmatprep.subr.mxu0 %v375
        %612 = vmatpush1.msra.mxu0 %v374
        %613 = vmatprep.subr.mxu0 %v371
        %614 = vmatpush1.msra.mxu0 %v370
        %615 = vmatprep.subr.mxu0 %v367
        %616 = vmatpush1.msra.mxu0 %v366
        %617 = vmatprep.subr.mxu0 %v363
        %618 = vmatpush1.msra.mxu0 %v362
        %619 = vmatprep.subr.mxu0 %v487
        %620 = vmatpush2.msra.mxu0 %v486
        %621 = vmatprep.subr.mxu0 %v483
        %622 = vmatpush2.msra.mxu0 %v482
        %623 = vmatprep.subr.mxu0 %v479
        %624 = vmatpush2.msra.mxu0 %v478
        %625 = vmatprep.subr.mxu0 %v475
        %626 = vmatpush2.msra.mxu0 %v474
        %627 = vmatprep.subr.mxu0 %v471
        %628 = vmatpush2.msra.mxu0 %v470
        %629 = vmatprep.subr.mxu0 %v467
        %630 = vmatpush2.msra.mxu0 %v466
        %631 = vmatprep.subr.mxu0 %v463
        %632 = vmatpush2.msra.mxu0 %v462
        %633 = vmatprep.subr.mxu0 %v459
        %634 = vmatpush2.msra.mxu0 %v458
        %635 = vmatprep.subr.mxu0 %v455
        %636 = vmatpush2.msra.mxu0 %v454
        %637 = vmatprep.subr.mxu0 %v451
        %638 = vmatpush2.msra.mxu0 %v450
        %639 = vmatprep.subr.mxu0 %v447
        %640 = vmatpush2.msra.mxu0 %v446
        %641 = vmatprep.subr.mxu0 %v443
        %642 = vmatpush2.msra.mxu0 %v442
        %643 = vmatprep.subr.mxu0 %v439
        %644 = vmatpush2.msra.mxu0 %v438
        %645 = vmatprep.subr.mxu0 %v435
        %646 = vmatpush2.msra.mxu0 %v434
        %647 = vmatprep.subr.mxu0 %v431
        %648 = vmatpush2.msra.mxu0 %v430
        %649 = vmatprep.subr.mxu0 %v427
        %650 = vmatpush2.msra.mxu0 %v426
        %651 = vmatprep.mubr.f32.mxu0 %v357
        %652 = vmatmul.mubr.f32.gmra.mxu0 %v356
        %v653 = vpop.f32.mrf.mxu0
        %v654 = vadd.f32 %v501, %v653
        %v655 = vpop.f32.mrf.mxu0
        %v656 = vadd.f32 %v505, %v655
        %657 = vmatprep.mubr.f32.mxu0 %v359
        %658 = vmatmul.mubr.f32.gmra.mxu0 %v358
        %v659 = vpop.f32.mrf.mxu0
        %v660 = vadd.f32 %v501, %v659
        %v661 = vpop.f32.mrf.mxu0
        %v662 = vadd.f32 %v505, %v661
        %663 = vdwg.mxu0
        %v664 = vmax.f32 %v577, 0.0
        %v665 = vmax.f32 %v579, 0.0
        %v666 = vmax.f32 %v654, 0.0
        %v667 = vmax.f32 %v656, 0.0
        %v668 = vmax.f32 %v583, 0.0
        %v669 = vmax.f32 %v585, 0.0
        %v670 = vmax.f32 %v660, 0.0
        %v671 = vmax.f32 %v662, 0.0
        %v672 = vld [vmem:[#allocation8] sm:$0xff]
        %v673 = vld [vmem:[#allocation8 + $0x8] sm:$0xff]
        %v674 = vld [vmem:[#allocation8 + $0x10] sm:$0xff]
        %v675 = vld [vmem:[#allocation8 + $0x18] sm:$0xff]
        %v676 = vld [vmem:[#allocation8 + $0x20] sm:$0xff]
        %v677 = vld [vmem:[#allocation8 + $0x28] sm:$0xff]
        %v678 = vld [vmem:[#allocation8 + $0x30] sm:$0xff]
        %v679 = vld [vmem:[#allocation8 + $0x38] sm:$0xff]
        %v680 = vld [vmem:[#allocation8 + $0x40] sm:$0xff]
        %v681 = vld [vmem:[#allocation8 + $0x48] sm:$0xff]
        %v682 = vld [vmem:[#allocation8 + $0x50] sm:$0xff]
        %v683 = vld [vmem:[#allocation8 + $0x58] sm:$0xff]
        %v684 = vld [vmem:[#allocation8 + $0x60] sm:$0xff]
        %v685 = vld [vmem:[#allocation8 + $0x68] sm:$0xff]
        %v686 = vld [vmem:[#allocation8 + $0x70] sm:$0xff]
        %v687 = vld [vmem:[#allocation8 + $0x78] sm:$0xff]
        %v688 = vld [vmem:[#allocation8 + $0x80] sm:$0xff]
        %v689 = vld [vmem:[#allocation8 + $0x88] sm:$0xff]
        %v690 = vld [vmem:[#allocation8 + $0x90] sm:$0xff]
        %v691 = vld [vmem:[#allocation8 + $0x98] sm:$0xff]
        %v692 = vld [vmem:[#allocation8 + $0xa0] sm:$0xff]
        %v693 = vld [vmem:[#allocation8 + $0xa8] sm:$0xff]
        %v694 = vld [vmem:[#allocation8 + $0xb0] sm:$0xff]
        %v695 = vld [vmem:[#allocation8 + $0xb8] sm:$0xff]
        %v696 = vld [vmem:[#allocation8 + $0xc0] sm:$0xff]
        %v697 = vld [vmem:[#allocation8 + $0xc8] sm:$0xff]
        %v698 = vld [vmem:[#allocation8 + $0xd0] sm:$0xff]
        %v699 = vld [vmem:[#allocation8 + $0xd8] sm:$0xff]
        %v700 = vld [vmem:[#allocation8 + $0xe0] sm:$0xff]
        %v701 = vld [vmem:[#allocation8 + $0xe8] sm:$0xff]
        %v702 = vld [vmem:[#allocation8 + $0xf0] sm:$0xff]
        %v703 = vld [vmem:[#allocation8 + $0xf8] sm:$0xff]
        %v704 = vld [vmem:[#allocation8 + $0x100] sm:$0xff]
        %v705 = vld [vmem:[#allocation8 + $0x108] sm:$0xff]
        %v706 = vld [vmem:[#allocation8 + $0x110] sm:$0xff]
        %v707 = vld [vmem:[#allocation8 + $0x118] sm:$0xff]
        %v708 = vld [vmem:[#allocation8 + $0x120] sm:$0xff]
        %v709 = vld [vmem:[#allocation8 + $0x128] sm:$0xff]
        %v710 = vld [vmem:[#allocation8 + $0x130] sm:$0xff]
        %v711 = vld [vmem:[#allocation8 + $0x138] sm:$0xff]
        %v712 = vld [vmem:[#allocation8 + $0x140] sm:$0xff]
        %v713 = vld [vmem:[#allocation8 + $0x148] sm:$0xff]
        %v714 = vld [vmem:[#allocation8 + $0x150] sm:$0xff]
        %v715 = vld [vmem:[#allocation8 + $0x158] sm:$0xff]
        %v716 = vld [vmem:[#allocation8 + $0x160] sm:$0xff]
        %v717 = vld [vmem:[#allocation8 + $0x168] sm:$0xff]
        %v718 = vld [vmem:[#allocation8 + $0x170] sm:$0xff]
        %v719 = vld [vmem:[#allocation8 + $0x178] sm:$0xff]
        %v720 = vld [vmem:[#allocation8 + $0x180] sm:$0xff]
        %v721 = vld [vmem:[#allocation8 + $0x188] sm:$0xff]
        %v722 = vld [vmem:[#allocation8 + $0x190] sm:$0xff]
        %v723 = vld [vmem:[#allocation8 + $0x198] sm:$0xff]
        %v724 = vld [vmem:[#allocation8 + $0x1a0] sm:$0xff]
        %v725 = vld [vmem:[#allocation8 + $0x1a8] sm:$0xff]
        %v726 = vld [vmem:[#allocation8 + $0x1b0] sm:$0xff]
        %v727 = vld [vmem:[#allocation8 + $0x1b8] sm:$0xff]
        %v728 = vld [vmem:[#allocation8 + $0x1c0] sm:$0xff]
        %v729 = vld [vmem:[#allocation8 + $0x1c8] sm:$0xff]
        %v730 = vld [vmem:[#allocation8 + $0x1d0] sm:$0xff]
        %v731 = vld [vmem:[#allocation8 + $0x1d8] sm:$0xff]
        %v732 = vld [vmem:[#allocation8 + $0x1e0] sm:$0xff]
        %v733 = vld [vmem:[#allocation8 + $0x1e8] sm:$0xff]
        %v734 = vld [vmem:[#allocation8 + $0x1f0] sm:$0xff]
        %v735 = vld [vmem:[#allocation8 + $0x1f8] sm:$0xff]
        %v736 = vld [vmem:[#allocation8 + $0x200] sm:$0xff]
        %v737 = vld [vmem:[#allocation8 + $0x208] sm:$0xff]
        %v738 = vld [vmem:[#allocation8 + $0x210] sm:$0xff]
        %v739 = vld [vmem:[#allocation8 + $0x218] sm:$0xff]
        %v740 = vld [vmem:[#allocation8 + $0x220] sm:$0xff]
        %v741 = vld [vmem:[#allocation8 + $0x228] sm:$0xff]
        %v742 = vld [vmem:[#allocation8 + $0x230] sm:$0xff]
        %v743 = vld [vmem:[#allocation8 + $0x238] sm:$0xff]
        %v744 = vld [vmem:[#allocation8 + $0x240] sm:$0xff]
        %v745 = vld [vmem:[#allocation8 + $0x248] sm:$0xff]
        %v746 = vld [vmem:[#allocation8 + $0x250] sm:$0xff]
        %v747 = vld [vmem:[#allocation8 + $0x258] sm:$0xff]
        %v748 = vld [vmem:[#allocation8 + $0x260] sm:$0xff]
        %v749 = vld [vmem:[#allocation8 + $0x268] sm:$0xff]
        %v750 = vld [vmem:[#allocation8 + $0x270] sm:$0xff]
        %v751 = vld [vmem:[#allocation8 + $0x278] sm:$0xff]
        %v752 = vld [vmem:[#allocation8 + $0x280] sm:$0xff]
        %v753 = vld [vmem:[#allocation8 + $0x288] sm:$0xff]
        %v754 = vld [vmem:[#allocation8 + $0x290] sm:$0xff]
        %v755 = vld [vmem:[#allocation8 + $0x298] sm:$0xff]
        %v756 = vld [vmem:[#allocation8 + $0x2a0] sm:$0xff]
        %v757 = vld [vmem:[#allocation8 + $0x2a8] sm:$0xff]
        %v758 = vld [vmem:[#allocation8 + $0x2b0] sm:$0xff]
        %v759 = vld [vmem:[#allocation8 + $0x2b8] sm:$0xff]
        %v760 = vld [vmem:[#allocation8 + $0x2c0] sm:$0xff]
        %v761 = vld [vmem:[#allocation8 + $0x2c8] sm:$0xff]
        %v762 = vld [vmem:[#allocation8 + $0x2d0] sm:$0xff]
        %v763 = vld [vmem:[#allocation8 + $0x2d8] sm:$0xff]
        %v764 = vld [vmem:[#allocation8 + $0x2e0] sm:$0xff]
        %v765 = vld [vmem:[#allocation8 + $0x2e8] sm:$0xff]
        %v766 = vld [vmem:[#allocation8 + $0x2f0] sm:$0xff]
        %v767 = vld [vmem:[#allocation8 + $0x2f8] sm:$0xff]
        %v768 = vld [vmem:[#allocation8 + $0x300] sm:$0xff]
        %v769 = vld [vmem:[#allocation8 + $0x308] sm:$0xff]
        %v770 = vld [vmem:[#allocation8 + $0x310] sm:$0xff]
        %v771 = vld [vmem:[#allocation8 + $0x318] sm:$0xff]
        %v772 = vld [vmem:[#allocation8 + $0x320] sm:$0xff]
        %v773 = vld [vmem:[#allocation8 + $0x328] sm:$0xff]
        %v774 = vld [vmem:[#allocation8 + $0x330] sm:$0xff]
        %v775 = vld [vmem:[#allocation8 + $0x338] sm:$0xff]
        %v776 = vld [vmem:[#allocation8 + $0x340] sm:$0xff]
        %v777 = vld [vmem:[#allocation8 + $0x348] sm:$0xff]
        %v778 = vld [vmem:[#allocation8 + $0x350] sm:$0xff]
        %v779 = vld [vmem:[#allocation8 + $0x358] sm:$0xff]
        %v780 = vld [vmem:[#allocation8 + $0x360] sm:$0xff]
        %v781 = vld [vmem:[#allocation8 + $0x368] sm:$0xff]
        %v782 = vld [vmem:[#allocation8 + $0x370] sm:$0xff]
        %v783 = vld [vmem:[#allocation8 + $0x378] sm:$0xff]
        %v784 = vld [vmem:[#allocation8 + $0x380] sm:$0xff]
        %v785 = vld [vmem:[#allocation8 + $0x388] sm:$0xff]
        %v786 = vld [vmem:[#allocation8 + $0x390] sm:$0xff]
        %v787 = vld [vmem:[#allocation8 + $0x398] sm:$0xff]
        %v788 = vld [vmem:[#allocation8 + $0x3a0] sm:$0xff]
        %v789 = vld [vmem:[#allocation8 + $0x3a8] sm:$0xff]
        %v790 = vld [vmem:[#allocation8 + $0x3b0] sm:$0xff]
        %v791 = vld [vmem:[#allocation8 + $0x3b8] sm:$0xff]
        %v792 = vld [vmem:[#allocation8 + $0x3c0] sm:$0xff]
        %v793 = vld [vmem:[#allocation8 + $0x3c8] sm:$0xff]
        %v794 = vld [vmem:[#allocation8 + $0x3d0] sm:$0xff]
        %v795 = vld [vmem:[#allocation8 + $0x3d8] sm:$0xff]
        %v796 = vld [vmem:[#allocation8 + $0x3e0] sm:$0xff]
        %v797 = vld [vmem:[#allocation8 + $0x3e8] sm:$0xff]
        %v798 = vld [vmem:[#allocation8 + $0x3f0] sm:$0xff]
        %v799 = vld [vmem:[#allocation8 + $0x3f8] sm:$0xff]
        %v800 = vld [vmem:[#allocation8 + $0x400] sm:$0xff]
        %v801 = vld [vmem:[#allocation8 + $0x408] sm:$0xff]
        %v802 = vld [vmem:[#allocation8 + $0x410] sm:$0xff]
        %v803 = vld [vmem:[#allocation8 + $0x418] sm:$0xff]
        %v804 = vld [vmem:[#allocation8 + $0x420] sm:$0xff]
        %v805 = vld [vmem:[#allocation8 + $0x428] sm:$0xff]
        %v806 = vld [vmem:[#allocation8 + $0x430] sm:$0xff]
        %v807 = vld [vmem:[#allocation8 + $0x438] sm:$0xff]
        %v808 = vld [vmem:[#allocation8 + $0x440] sm:$0xff]
        %v809 = vld [vmem:[#allocation8 + $0x448] sm:$0xff]
        %v810 = vld [vmem:[#allocation8 + $0x450] sm:$0xff]
        %v811 = vld [vmem:[#allocation8 + $0x458] sm:$0xff]
        %v812 = vld [vmem:[#allocation8 + $0x460] sm:$0xff]
        %v813 = vld [vmem:[#allocation8 + $0x468] sm:$0xff]
        %v814 = vld [vmem:[#allocation8 + $0x470] sm:$0xff]
        %v815 = vld [vmem:[#allocation8 + $0x478] sm:$0xff]
        %v816 = vld [vmem:[#allocation8 + $0x480] sm:$0xff]
        %v817 = vld [vmem:[#allocation8 + $0x488] sm:$0xff]
        %v818 = vld [vmem:[#allocation8 + $0x490] sm:$0xff]
        %v819 = vld [vmem:[#allocation8 + $0x498] sm:$0xff]
        %v820 = vld [vmem:[#allocation8 + $0x4a0] sm:$0xff]
        %v821 = vld [vmem:[#allocation8 + $0x4a8] sm:$0xff]
        %v822 = vld [vmem:[#allocation8 + $0x4b0] sm:$0xff]
        %v823 = vld [vmem:[#allocation8 + $0x4b8] sm:$0xff]
        %v824 = vld [vmem:[#allocation8 + $0x4c0] sm:$0xff]
        %v825 = vld [vmem:[#allocation8 + $0x4c8] sm:$0xff]
        %v826 = vld [vmem:[#allocation8 + $0x4d0] sm:$0xff]
        %v827 = vld [vmem:[#allocation8 + $0x4d8] sm:$0xff]
        %v828 = vld [vmem:[#allocation8 + $0x4e0] sm:$0xff]
        %v829 = vld [vmem:[#allocation8 + $0x4e8] sm:$0xff]
        %v830 = vld [vmem:[#allocation8 + $0x4f0] sm:$0xff]
        %v831 = vld [vmem:[#allocation8 + $0x4f8] sm:$0xff]
        %v832 = vld [vmem:[#allocation8 + $0x500] sm:$0xff]
        %v833 = vld [vmem:[#allocation8 + $0x508] sm:$0xff]
        %v834 = vld [vmem:[#allocation8 + $0x510] sm:$0xff]
        %v835 = vld [vmem:[#allocation8 + $0x518] sm:$0xff]
        %v836 = vld [vmem:[#allocation8 + $0x520] sm:$0xff]
        %v837 = vld [vmem:[#allocation8 + $0x528] sm:$0xff]
        %v838 = vld [vmem:[#allocation8 + $0x530] sm:$0xff]
        %v839 = vld [vmem:[#allocation8 + $0x538] sm:$0xff]
        %v840 = vld [vmem:[#allocation8 + $0x540] sm:$0xff]
        %v841 = vld [vmem:[#allocation8 + $0x548] sm:$0xff]
        %v842 = vld [vmem:[#allocation8 + $0x550] sm:$0xff]
        %v843 = vld [vmem:[#allocation8 + $0x558] sm:$0xff]
        %v844 = vld [vmem:[#allocation8 + $0x560] sm:$0xff]
        %v845 = vld [vmem:[#allocation8 + $0x568] sm:$0xff]
        %v846 = vld [vmem:[#allocation8 + $0x570] sm:$0xff]
        %v847 = vld [vmem:[#allocation8 + $0x578] sm:$0xff]
        %v848 = vld [vmem:[#allocation8 + $0x580] sm:$0xff]
        %v849 = vld [vmem:[#allocation8 + $0x588] sm:$0xff]
        %v850 = vld [vmem:[#allocation8 + $0x590] sm:$0xff]
        %v851 = vld [vmem:[#allocation8 + $0x598] sm:$0xff]
        %v852 = vld [vmem:[#allocation8 + $0x5a0] sm:$0xff]
        %v853 = vld [vmem:[#allocation8 + $0x5a8] sm:$0xff]
        %v854 = vld [vmem:[#allocation8 + $0x5b0] sm:$0xff]
        %v855 = vld [vmem:[#allocation8 + $0x5b8] sm:$0xff]
        %v856 = vld [vmem:[#allocation8 + $0x5c0] sm:$0xff]
        %v857 = vld [vmem:[#allocation8 + $0x5c8] sm:$0xff]
        %v858 = vld [vmem:[#allocation8 + $0x5d0] sm:$0xff]
        %v859 = vld [vmem:[#allocation8 + $0x5d8] sm:$0xff]
        %v860 = vld [vmem:[#allocation8 + $0x5e0] sm:$0xff]
        %v861 = vld [vmem:[#allocation8 + $0x5e8] sm:$0xff]
        %v862 = vld [vmem:[#allocation8 + $0x5f0] sm:$0xff]
        %v863 = vld [vmem:[#allocation8 + $0x5f8] sm:$0xff]
        %v864 = vld [vmem:[#allocation8 + $0x600] sm:$0xff]
        %v865 = vld [vmem:[#allocation8 + $0x608] sm:$0xff]
        %v866 = vld [vmem:[#allocation8 + $0x610] sm:$0xff]
        %v867 = vld [vmem:[#allocation8 + $0x618] sm:$0xff]
        %v868 = vld [vmem:[#allocation8 + $0x620] sm:$0xff]
        %v869 = vld [vmem:[#allocation8 + $0x628] sm:$0xff]
        %v870 = vld [vmem:[#allocation8 + $0x630] sm:$0xff]
        %v871 = vld [vmem:[#allocation8 + $0x638] sm:$0xff]
        %v872 = vld [vmem:[#allocation8 + $0x640] sm:$0xff]
        %v873 = vld [vmem:[#allocation8 + $0x648] sm:$0xff]
        %v874 = vld [vmem:[#allocation8 + $0x650] sm:$0xff]
        %v875 = vld [vmem:[#allocation8 + $0x658] sm:$0xff]
        %v876 = vld [vmem:[#allocation8 + $0x660] sm:$0xff]
        %v877 = vld [vmem:[#allocation8 + $0x668] sm:$0xff]
        %v878 = vld [vmem:[#allocation8 + $0x670] sm:$0xff]
        %v879 = vld [vmem:[#allocation8 + $0x678] sm:$0xff]
        %v880 = vld [vmem:[#allocation8 + $0x680] sm:$0xff]
        %v881 = vld [vmem:[#allocation8 + $0x688] sm:$0xff]
        %v882 = vld [vmem:[#allocation8 + $0x690] sm:$0xff]
        %v883 = vld [vmem:[#allocation8 + $0x698] sm:$0xff]
        %v884 = vld [vmem:[#allocation8 + $0x6a0] sm:$0xff]
        %v885 = vld [vmem:[#allocation8 + $0x6a8] sm:$0xff]
        %v886 = vld [vmem:[#allocation8 + $0x6b0] sm:$0xff]
        %v887 = vld [vmem:[#allocation8 + $0x6b8] sm:$0xff]
        %v888 = vld [vmem:[#allocation8 + $0x6c0] sm:$0xff]
        %v889 = vld [vmem:[#allocation8 + $0x6c8] sm:$0xff]
        %v890 = vld [vmem:[#allocation8 + $0x6d0] sm:$0xff]
        %v891 = vld [vmem:[#allocation8 + $0x6d8] sm:$0xff]
        %v892 = vld [vmem:[#allocation8 + $0x6e0] sm:$0xff]
        %v893 = vld [vmem:[#allocation8 + $0x6e8] sm:$0xff]
        %v894 = vld [vmem:[#allocation8 + $0x6f0] sm:$0xff]
        %v895 = vld [vmem:[#allocation8 + $0x6f8] sm:$0xff]
        %v896 = vld [vmem:[#allocation8 + $0x700] sm:$0xff]
        %v897 = vld [vmem:[#allocation8 + $0x708] sm:$0xff]
        %v898 = vld [vmem:[#allocation8 + $0x710] sm:$0xff]
        %v899 = vld [vmem:[#allocation8 + $0x718] sm:$0xff]
        %v900 = vld [vmem:[#allocation8 + $0x720] sm:$0xff]
        %v901 = vld [vmem:[#allocation8 + $0x728] sm:$0xff]
        %v902 = vld [vmem:[#allocation8 + $0x730] sm:$0xff]
        %v903 = vld [vmem:[#allocation8 + $0x738] sm:$0xff]
        %v904 = vld [vmem:[#allocation8 + $0x740] sm:$0xff]
        %v905 = vld [vmem:[#allocation8 + $0x748] sm:$0xff]
        %v906 = vld [vmem:[#allocation8 + $0x750] sm:$0xff]
        %v907 = vld [vmem:[#allocation8 + $0x758] sm:$0xff]
        %v908 = vld [vmem:[#allocation8 + $0x760] sm:$0xff]
        %v909 = vld [vmem:[#allocation8 + $0x768] sm:$0xff]
        %v910 = vld [vmem:[#allocation8 + $0x770] sm:$0xff]
        %v911 = vld [vmem:[#allocation8 + $0x778] sm:$0xff]
        %v912 = vld [vmem:[#allocation8 + $0x780] sm:$0xff]
        %v913 = vld [vmem:[#allocation8 + $0x788] sm:$0xff]
        %v914 = vld [vmem:[#allocation8 + $0x790] sm:$0xff]
        %v915 = vld [vmem:[#allocation8 + $0x798] sm:$0xff]
        %v916 = vld [vmem:[#allocation8 + $0x7a0] sm:$0xff]
        %v917 = vld [vmem:[#allocation8 + $0x7a8] sm:$0xff]
        %v918 = vld [vmem:[#allocation8 + $0x7b0] sm:$0xff]
        %v919 = vld [vmem:[#allocation8 + $0x7b8] sm:$0xff]
        %v920 = vld [vmem:[#allocation8 + $0x7c0] sm:$0xff]
        %v921 = vld [vmem:[#allocation8 + $0x7c8] sm:$0xff]
        %v922 = vld [vmem:[#allocation8 + $0x7d0] sm:$0xff]
        %v923 = vld [vmem:[#allocation8 + $0x7d8] sm:$0xff]
        %v924 = vld [vmem:[#allocation8 + $0x7e0] sm:$0xff]
        %v925 = vld [vmem:[#allocation8 + $0x7e8] sm:$0xff]
        %v926 = vld [vmem:[#allocation8 + $0x7f0] sm:$0xff]
        %v927 = vld [vmem:[#allocation8 + $0x7f8] sm:$0xff]
        %v928 = vld [vmem:[%s4] sm:$0xf]
        %v930 = vlaneseq
        %v931 = vshrl.u32 %v930, 7
        %v932 = vsub.s32 0, %v931
        %v933 = vrot.slane %v928, %v932
        %v934 = vlaneseq
        %v935 = vshrl.u32 %v934, 7
        %v936 = vsub.s32 1, %v935
        %v937 = vrot.slane %v928, %v936
        %v938 = vlaneseq
        %v939 = vshrl.u32 %v938, 7
        %v940 = vsub.s32 2, %v939
        %v941 = vrot.slane %v928, %v940
        %v942 = vlaneseq
        %v943 = vshrl.u32 %v942, 7
        %v944 = vsub.s32 3, %v943
        %v945 = vrot.slane %v928, %v944
        %950 = vmatprep.subr.mxu0 %v733
        %951 = vmatpush1.msra.mxu0 %v732
        %952 = vmatprep.subr.mxu0 %v729
        %953 = vmatpush1.msra.mxu0 %v728
        %954 = vmatprep.subr.mxu0 %v725
        %955 = vmatpush1.msra.mxu0 %v724
        %956 = vmatprep.subr.mxu0 %v721
        %957 = vmatpush1.msra.mxu0 %v720
        %958 = vmatprep.subr.mxu0 %v717
        %959 = vmatpush1.msra.mxu0 %v716
        %960 = vmatprep.subr.mxu0 %v713
        %961 = vmatpush1.msra.mxu0 %v712
        %962 = vmatprep.subr.mxu0 %v709
        %963 = vmatpush1.msra.mxu0 %v708
        %964 = vmatprep.subr.mxu0 %v705
        %965 = vmatpush1.msra.mxu0 %v704
        %966 = vmatprep.subr.mxu0 %v701
        %967 = vmatpush1.msra.mxu0 %v700
        %968 = vmatprep.subr.mxu0 %v697
        %969 = vmatpush1.msra.mxu0 %v696
        %970 = vmatprep.subr.mxu0 %v693
        %971 = vmatpush1.msra.mxu0 %v692
        %972 = vmatprep.subr.mxu0 %v689
        %973 = vmatpush1.msra.mxu0 %v688
        %974 = vmatprep.subr.mxu0 %v685
        %975 = vmatpush1.msra.mxu0 %v684
        %976 = vmatprep.subr.mxu0 %v681
        %977 = vmatpush1.msra.mxu0 %v680
        %978 = vmatprep.subr.mxu0 %v677
        %979 = vmatpush1.msra.mxu0 %v676
        %980 = vmatprep.subr.mxu0 %v673
        %981 = vmatpush1.msra.mxu0 %v672
        %982 = vmatprep.subr.mxu0 %v797
        %983 = vmatpush2.msra.mxu0 %v796
        %984 = vmatprep.subr.mxu0 %v793
        %985 = vmatpush2.msra.mxu0 %v792
        %986 = vmatprep.subr.mxu0 %v789
        %987 = vmatpush2.msra.mxu0 %v788
        %988 = vmatprep.subr.mxu0 %v785
        %989 = vmatpush2.msra.mxu0 %v784
        %990 = vmatprep.subr.mxu0 %v781
        %991 = vmatpush2.msra.mxu0 %v780
        %992 = vmatprep.subr.mxu0 %v777
        %993 = vmatpush2.msra.mxu0 %v776
        %994 = vmatprep.subr.mxu0 %v773
        %995 = vmatpush2.msra.mxu0 %v772
        %996 = vmatprep.subr.mxu0 %v769
        %997 = vmatpush2.msra.mxu0 %v768
        %998 = vmatprep.subr.mxu0 %v765
        %999 = vmatpush2.msra.mxu0 %v764
        %1000 = vmatprep.subr.mxu0 %v761
        %1001 = vmatpush2.msra.mxu0 %v760
        %1002 = vmatprep.subr.mxu0 %v757
        %1003 = vmatpush2.msra.mxu0 %v756
        %1004 = vmatprep.subr.mxu0 %v753
        %1005 = vmatpush2.msra.mxu0 %v752
        %1006 = vmatprep.subr.mxu0 %v749
        %1007 = vmatpush2.msra.mxu0 %v748
        %1008 = vmatprep.subr.mxu0 %v745
        %1009 = vmatpush2.msra.mxu0 %v744
        %1010 = vmatprep.subr.mxu0 %v741
        %1011 = vmatpush2.msra.mxu0 %v740
        %1012 = vmatprep.subr.mxu0 %v737
        %1013 = vmatpush2.msra.mxu0 %v736
        %1014 = vmatprep.mubr.f32.mxu0 %v665
        %1015 = vmatmul.mubr.f32.gmra.mxu0 %v664
        %v1016 = vpop.f32.mrf.mxu0
        %v1017 = vadd.f32 %v933, %v1016
        %v1018 = vpop.f32.mrf.mxu0
        %v1019 = vadd.f32 %v937, %v1018
        %1020 = vmatprep.mubr.f32.mxu0 %v669
        %1021 = vmatmul.mubr.f32.gmra.mxu0 %v668
        %v1022 = vpop.f32.mrf.mxu0
        %v1023 = vadd.f32 %v933, %v1022
        %v1024 = vpop.f32.mrf.mxu0
        %v1025 = vadd.f32 %v937, %v1024
        %1026 = vdwg.mxu0
        %1027 = vmatprep.subr.mxu0 %v861
        %1028 = vmatpush1.msra.mxu0 %v860
        %1029 = vmatprep.subr.mxu0 %v857
        %1030 = vmatpush1.msra.mxu0 %v856
        %1031 = vmatprep.subr.mxu0 %v853
        %1032 = vmatpush1.msra.mxu0 %v852
        %1033 = vmatprep.subr.mxu0 %v849
        %1034 = vmatpush1.msra.mxu0 %v848
        %1035 = vmatprep.subr.mxu0 %v845
        %1036 = vmatpush1.msra.mxu0 %v844
        %1037 = vmatprep.subr.mxu0 %v841
        %1038 = vmatpush1.msra.mxu0 %v840
        %1039 = vmatprep.subr.mxu0 %v837
        %1040 = vmatpush1.msra.mxu0 %v836
        %1041 = vmatprep.subr.mxu0 %v833
        %1042 = vmatpush1.msra.mxu0 %v832
        %1043 = vmatprep.subr.mxu0 %v829
        %1044 = vmatpush1.msra.mxu0 %v828
        %1045 = vmatprep.subr.mxu0 %v825
        %1046 = vmatpush1.msra.mxu0 %v824
        %1047 = vmatprep.subr.mxu0 %v821
        %1048 = vmatpush1.msra.mxu0 %v820
        %1049 = vmatprep.subr.mxu0 %v817
        %1050 = vmatpush1.msra.mxu0 %v816
        %1051 = vmatprep.subr.mxu0 %v813
        %1052 = vmatpush1.msra.mxu0 %v812
        %1053 = vmatprep.subr.mxu0 %v809
        %1054 = vmatpush1.msra.mxu0 %v808
        %1055 = vmatprep.subr.mxu0 %v805
        %1056 = vmatpush1.msra.mxu0 %v804
        %1057 = vmatprep.subr.mxu0 %v801
        %1058 = vmatpush1.msra.mxu0 %v800
        %1059 = vmatprep.subr.mxu0 %v925
        %1060 = vmatpush2.msra.mxu0 %v924
        %1061 = vmatprep.subr.mxu0 %v921
        %1062 = vmatpush2.msra.mxu0 %v920
        %1063 = vmatprep.subr.mxu0 %v917
        %1064 = vmatpush2.msra.mxu0 %v916
        %1065 = vmatprep.subr.mxu0 %v913
        %1066 = vmatpush2.msra.mxu0 %v912
        %1067 = vmatprep.subr.mxu0 %v909
        %1068 = vmatpush2.msra.mxu0 %v908
        %1069 = vmatprep.subr.mxu0 %v905
        %1070 = vmatpush2.msra.mxu0 %v904
        %1071 = vmatprep.subr.mxu0 %v901
        %1072 = vmatpush2.msra.mxu0 %v900
        %1073 = vmatprep.subr.mxu0 %v897
        %1074 = vmatpush2.msra.mxu0 %v896
        %1075 = vmatprep.subr.mxu0 %v893
        %1076 = vmatpush2.msra.mxu0 %v892
        %1077 = vmatprep.subr.mxu0 %v889
        %1078 = vmatpush2.msra.mxu0 %v888
        %1079 = vmatprep.subr.mxu0 %v885
        %1080 = vmatpush2.msra.mxu0 %v884
        %1081 = vmatprep.subr.mxu0 %v881
        %1082 = vmatpush2.msra.mxu0 %v880
        %1083 = vmatprep.subr.mxu0 %v877
        %1084 = vmatpush2.msra.mxu0 %v876
        %1085 = vmatprep.subr.mxu0 %v873
        %1086 = vmatpush2.msra.mxu0 %v872
        %1087 = vmatprep.subr.mxu0 %v869
        %1088 = vmatpush2.msra.mxu0 %v868
        %1089 = vmatprep.subr.mxu0 %v865
        %1090 = vmatpush2.msra.mxu0 %v864
        %1091 = vmatprep.mubr.f32.mxu0 %v667
        %1092 = vmatmul.mubr.f32.gmra.mxu0 %v666
        %v1093 = vpop.f32.mrf.mxu0
        %v1094 = vadd.f32 %v1017, %v1093
        %v1095 = vpop.f32.mrf.mxu0
        %v1096 = vadd.f32 %v1019, %v1095
        %1097 = vmatprep.mubr.f32.mxu0 %v671
        %1098 = vmatmul.mubr.f32.gmra.mxu0 %v670
        %v1099 = vpop.f32.mrf.mxu0
        %v1100 = vadd.f32 %v1023, %v1099
        %v1101 = vpop.f32.mrf.mxu0
        %v1102 = vadd.f32 %v1025, %v1101
        %1103 = vdwg.mxu0
        %1104 = vmatprep.subr.mxu0 %v735
        %1105 = vmatpush1.msra.mxu0 %v734
        %1106 = vmatprep.subr.mxu0 %v731
        %1107 = vmatpush1.msra.mxu0 %v730
        %1108 = vmatprep.subr.mxu0 %v727
        %1109 = vmatpush1.msra.mxu0 %v726
        %1110 = vmatprep.subr.mxu0 %v723
        %1111 = vmatpush1.msra.mxu0 %v722
        %1112 = vmatprep.subr.mxu0 %v719
        %1113 = vmatpush1.msra.mxu0 %v718
        %1114 = vmatprep.subr.mxu0 %v715
        %1115 = vmatpush1.msra.mxu0 %v714
        %1116 = vmatprep.subr.mxu0 %v711
        %1117 = vmatpush1.msra.mxu0 %v710
        %1118 = vmatprep.subr.mxu0 %v707
        %1119 = vmatpush1.msra.mxu0 %v706
        %1120 = vmatprep.subr.mxu0 %v703
        %1121 = vmatpush1.msra.mxu0 %v702
        %1122 = vmatprep.subr.mxu0 %v699
        %1123 = vmatpush1.msra.mxu0 %v698
        %1124 = vmatprep.subr.mxu0 %v695
        %1125 = vmatpush1.msra.mxu0 %v694
        %1126 = vmatprep.subr.mxu0 %v691
        %1127 = vmatpush1.msra.mxu0 %v690
        %1128 = vmatprep.subr.mxu0 %v687
        %1129 = vmatpush1.msra.mxu0 %v686
        %1130 = vmatprep.subr.mxu0 %v683
        %1131 = vmatpush1.msra.mxu0 %v682
        %1132 = vmatprep.subr.mxu0 %v679
        %1133 = vmatpush1.msra.mxu0 %v678
        %1134 = vmatprep.subr.mxu0 %v675
        %1135 = vmatpush1.msra.mxu0 %v674
        %1136 = vmatprep.subr.mxu0 %v799
        %1137 = vmatpush2.msra.mxu0 %v798
        %1138 = vmatprep.subr.mxu0 %v795
        %1139 = vmatpush2.msra.mxu0 %v794
        %1140 = vmatprep.subr.mxu0 %v791
        %1141 = vmatpush2.msra.mxu0 %v790
        %1142 = vmatprep.subr.mxu0 %v787
        %1143 = vmatpush2.msra.mxu0 %v786
        %1144 = vmatprep.subr.mxu0 %v783
        %1145 = vmatpush2.msra.mxu0 %v782
        %1146 = vmatprep.subr.mxu0 %v779
        %1147 = vmatpush2.msra.mxu0 %v778
        %1148 = vmatprep.subr.mxu0 %v775
        %1149 = vmatpush2.msra.mxu0 %v774
        %1150 = vmatprep.subr.mxu0 %v771
        %1151 = vmatpush2.msra.mxu0 %v770
        %1152 = vmatprep.subr.mxu0 %v767
        %1153 = vmatpush2.msra.mxu0 %v766
        %1154 = vmatprep.subr.mxu0 %v763
        %1155 = vmatpush2.msra.mxu0 %v762
        %1156 = vmatprep.subr.mxu0 %v759
        %1157 = vmatpush2.msra.mxu0 %v758
        %1158 = vmatprep.subr.mxu0 %v755
        %1159 = vmatpush2.msra.mxu0 %v754
        %1160 = vmatprep.subr.mxu0 %v751
        %1161 = vmatpush2.msra.mxu0 %v750
        %1162 = vmatprep.subr.mxu0 %v747
        %1163 = vmatpush2.msra.mxu0 %v746
        %1164 = vmatprep.subr.mxu0 %v743
        %1165 = vmatpush2.msra.mxu0 %v742
        %1166 = vmatprep.subr.mxu0 %v739
        %1167 = vmatpush2.msra.mxu0 %v738
        %1168 = vmatprep.mubr.f32.mxu0 %v665
        %1169 = vmatmul.mubr.f32.gmra.mxu0 %v664
        %v1170 = vpop.f32.mrf.mxu0
        %v1171 = vadd.f32 %v941, %v1170
        %v1172 = vpop.f32.mrf.mxu0
        %v1173 = vadd.f32 %v945, %v1172
        %1174 = vmatprep.mubr.f32.mxu0 %v669
        %1175 = vmatmul.mubr.f32.gmra.mxu0 %v668
        %v1176 = vpop.f32.mrf.mxu0
        %v1177 = vadd.f32 %v941, %v1176
        %v1178 = vpop.f32.mrf.mxu0
        %v1179 = vadd.f32 %v945, %v1178
        %1180 = vdwg.mxu0
        %1181 = vmatprep.subr.mxu0 %v863
        %1182 = vmatpush1.msra.mxu0 %v862
        %1183 = vmatprep.subr.mxu0 %v859
        %1184 = vmatpush1.msra.mxu0 %v858
        %1185 = vmatprep.subr.mxu0 %v855
        %1186 = vmatpush1.msra.mxu0 %v854
        %1187 = vmatprep.subr.mxu0 %v851
        %1188 = vmatpush1.msra.mxu0 %v850
        %1189 = vmatprep.subr.mxu0 %v847
        %1190 = vmatpush1.msra.mxu0 %v846
        %1191 = vmatprep.subr.mxu0 %v843
        %1192 = vmatpush1.msra.mxu0 %v842
        %1193 = vmatprep.subr.mxu0 %v839
        %1194 = vmatpush1.msra.mxu0 %v838
        %1195 = vmatprep.subr.mxu0 %v835
        %1196 = vmatpush1.msra.mxu0 %v834
        %1197 = vmatprep.subr.mxu0 %v831
        %1198 = vmatpush1.msra.mxu0 %v830
        %1199 = vmatprep.subr.mxu0 %v827
        %1200 = vmatpush1.msra.mxu0 %v826
        %1201 = vmatprep.subr.mxu0 %v823
        %1202 = vmatpush1.msra.mxu0 %v822
        %1203 = vmatprep.subr.mxu0 %v819
        %1204 = vmatpush1.msra.mxu0 %v818
        %1205 = vmatprep.subr.mxu0 %v815
        %1206 = vmatpush1.msra.mxu0 %v814
        %1207 = vmatprep.subr.mxu0 %v811
        %1208 = vmatpush1.msra.mxu0 %v810
        %1209 = vmatprep.subr.mxu0 %v807
        %1210 = vmatpush1.msra.mxu0 %v806
        %1211 = vmatprep.subr.mxu0 %v803
        %1212 = vmatpush1.msra.mxu0 %v802
        %1213 = vmatprep.subr.mxu0 %v927
        %1214 = vmatpush2.msra.mxu0 %v926
        %1215 = vmatprep.subr.mxu0 %v923
        %1216 = vmatpush2.msra.mxu0 %v922
        %1217 = vmatprep.subr.mxu0 %v919
        %1218 = vmatpush2.msra.mxu0 %v918
        %1219 = vmatprep.subr.mxu0 %v915
        %1220 = vmatpush2.msra.mxu0 %v914
        %1221 = vmatprep.subr.mxu0 %v911
        %1222 = vmatpush2.msra.mxu0 %v910
        %1223 = vmatprep.subr.mxu0 %v907
        %1224 = vmatpush2.msra.mxu0 %v906
        %1225 = vmatprep.subr.mxu0 %v903
        %1226 = vmatpush2.msra.mxu0 %v902
        %1227 = vmatprep.subr.mxu0 %v899
        %1228 = vmatpush2.msra.mxu0 %v898
        %1229 = vmatprep.subr.mxu0 %v895
        %1230 = vmatpush2.msra.mxu0 %v894
        %1231 = vmatprep.subr.mxu0 %v891
        %1232 = vmatpush2.msra.mxu0 %v890
        %1233 = vmatprep.subr.mxu0 %v887
        %1234 = vmatpush2.msra.mxu0 %v886
        %1235 = vmatprep.subr.mxu0 %v883
        %1236 = vmatpush2.msra.mxu0 %v882
        %1237 = vmatprep.subr.mxu0 %v879
        %1238 = vmatpush2.msra.mxu0 %v878
        %1239 = vmatprep.subr.mxu0 %v875
        %1240 = vmatpush2.msra.mxu0 %v874
        %1241 = vmatprep.subr.mxu0 %v871
        %1242 = vmatpush2.msra.mxu0 %v870
        %1243 = vmatprep.subr.mxu0 %v867
        %1244 = vmatpush2.msra.mxu0 %v866
        %1245 = vmatprep.mubr.f32.mxu0 %v667
        %1246 = vmatmul.mubr.f32.gmra.mxu0 %v666
        %v1247 = vpop.f32.mrf.mxu0
        %v1248 = vadd.f32 %v1171, %v1247
        %v1249 = vpop.f32.mrf.mxu0
        %v1250 = vadd.f32 %v1173, %v1249
        %1251 = vmatprep.mubr.f32.mxu0 %v671
        %1252 = vmatmul.mubr.f32.gmra.mxu0 %v670
        %v1253 = vpop.f32.mrf.mxu0
        %v1254 = vadd.f32 %v1177, %v1253
        %v1255 = vpop.f32.mrf.mxu0
        %v1256 = vadd.f32 %v1179, %v1255
        %1257 = vdwg.mxu0
        %v1258 = vmax.f32 %v1094, 0.0
        %v1259 = vmax.f32 %v1096, 0.0
        %v1260 = vmax.f32 %v1248, 0.0
        %v1261 = vmax.f32 %v1250, 0.0
        %v1262 = vmax.f32 %v1100, 0.0
        %v1263 = vmax.f32 %v1102, 0.0
        %v1264 = vmax.f32 %v1254, 0.0
        %v1265 = vmax.f32 %v1256, 0.0
        %v1266 = vld [vmem:[#allocation10] sm:$0xff]
        %v1267 = vld [vmem:[#allocation10 + $0x8] sm:$0xff]
        %v1268 = vld [vmem:[#allocation10 + $0x10] sm:$0xff]
        %v1269 = vld [vmem:[#allocation10 + $0x18] sm:$0xff]
        %v1270 = vld [vmem:[#allocation10 + $0x20] sm:$0xff]
        %v1271 = vld [vmem:[#allocation10 + $0x28] sm:$0xff]
        %v1272 = vld [vmem:[#allocation10 + $0x30] sm:$0xff]
        %v1273 = vld [vmem:[#allocation10 + $0x38] sm:$0xff]
        %v1274 = vld [vmem:[#allocation10 + $0x40] sm:$0xff]
        %v1275 = vld [vmem:[#allocation10 + $0x48] sm:$0xff]
        %v1276 = vld [vmem:[#allocation10 + $0x50] sm:$0xff]
        %v1277 = vld [vmem:[#allocation10 + $0x58] sm:$0xff]
        %v1278 = vld [vmem:[#allocation10 + $0x60] sm:$0xff]
        %v1279 = vld [vmem:[#allocation10 + $0x68] sm:$0xff]
        %v1280 = vld [vmem:[#allocation10 + $0x70] sm:$0xff]
        %v1281 = vld [vmem:[#allocation10 + $0x78] sm:$0xff]
        %v1282 = vld [vmem:[#allocation10 + $0x80] sm:$0xff]
        %v1283 = vld [vmem:[#allocation10 + $0x88] sm:$0xff]
        %v1284 = vld [vmem:[#allocation10 + $0x90] sm:$0xff]
        %v1285 = vld [vmem:[#allocation10 + $0x98] sm:$0xff]
        %v1286 = vld [vmem:[#allocation10 + $0xa0] sm:$0xff]
        %v1287 = vld [vmem:[#allocation10 + $0xa8] sm:$0xff]
        %v1288 = vld [vmem:[#allocation10 + $0xb0] sm:$0xff]
        %v1289 = vld [vmem:[#allocation10 + $0xb8] sm:$0xff]
        %v1290 = vld [vmem:[#allocation10 + $0xc0] sm:$0xff]
        %v1291 = vld [vmem:[#allocation10 + $0xc8] sm:$0xff]
        %v1292 = vld [vmem:[#allocation10 + $0xd0] sm:$0xff]
        %v1293 = vld [vmem:[#allocation10 + $0xd8] sm:$0xff]
        %v1294 = vld [vmem:[#allocation10 + $0xe0] sm:$0xff]
        %v1295 = vld [vmem:[#allocation10 + $0xe8] sm:$0xff]
        %v1296 = vld [vmem:[#allocation10 + $0xf0] sm:$0xff]
        %v1297 = vld [vmem:[#allocation10 + $0xf8] sm:$0xff]
        %v1298 = vld [vmem:[#allocation10 + $0x100] sm:$0xff]
        %v1299 = vld [vmem:[#allocation10 + $0x108] sm:$0xff]
        %v1300 = vld [vmem:[#allocation10 + $0x110] sm:$0xff]
        %v1301 = vld [vmem:[#allocation10 + $0x118] sm:$0xff]
        %v1302 = vld [vmem:[#allocation10 + $0x120] sm:$0xff]
        %v1303 = vld [vmem:[#allocation10 + $0x128] sm:$0xff]
        %v1304 = vld [vmem:[#allocation10 + $0x130] sm:$0xff]
        %v1305 = vld [vmem:[#allocation10 + $0x138] sm:$0xff]
        %v1306 = vld [vmem:[#allocation10 + $0x140] sm:$0xff]
        %v1307 = vld [vmem:[#allocation10 + $0x148] sm:$0xff]
        %v1308 = vld [vmem:[#allocation10 + $0x150] sm:$0xff]
        %v1309 = vld [vmem:[#allocation10 + $0x158] sm:$0xff]
        %v1310 = vld [vmem:[#allocation10 + $0x160] sm:$0xff]
        %v1311 = vld [vmem:[#allocation10 + $0x168] sm:$0xff]
        %v1312 = vld [vmem:[#allocation10 + $0x170] sm:$0xff]
        %v1313 = vld [vmem:[#allocation10 + $0x178] sm:$0xff]
        %v1314 = vld [vmem:[#allocation10 + $0x180] sm:$0xff]
        %v1315 = vld [vmem:[#allocation10 + $0x188] sm:$0xff]
        %v1316 = vld [vmem:[#allocation10 + $0x190] sm:$0xff]
        %v1317 = vld [vmem:[#allocation10 + $0x198] sm:$0xff]
        %v1318 = vld [vmem:[#allocation10 + $0x1a0] sm:$0xff]
        %v1319 = vld [vmem:[#allocation10 + $0x1a8] sm:$0xff]
        %v1320 = vld [vmem:[#allocation10 + $0x1b0] sm:$0xff]
        %v1321 = vld [vmem:[#allocation10 + $0x1b8] sm:$0xff]
        %v1322 = vld [vmem:[#allocation10 + $0x1c0] sm:$0xff]
        %v1323 = vld [vmem:[#allocation10 + $0x1c8] sm:$0xff]
        %v1324 = vld [vmem:[#allocation10 + $0x1d0] sm:$0xff]
        %v1325 = vld [vmem:[#allocation10 + $0x1d8] sm:$0xff]
        %v1326 = vld [vmem:[#allocation10 + $0x1e0] sm:$0xff]
        %v1327 = vld [vmem:[#allocation10 + $0x1e8] sm:$0xff]
        %v1328 = vld [vmem:[#allocation10 + $0x1f0] sm:$0xff]
        %v1329 = vld [vmem:[#allocation10 + $0x1f8] sm:$0xff]
        %v1330 = vld [vmem:[%s6] sm:$0x1]
        %v1332 = vlaneseq
        %v1333 = vshrl.u32 %v1332, 7
        %v1334 = vsub.s32 0, %v1333
        %v1335 = vrot.slane %v1330, %v1334
        %1337 = vmatprep.subr.mxu0 0.0
        %1338 = vmatpush1.msra.mxu0 %v1281
        %1339 = vmatprep.subr.mxu0 0.0
        %1340 = vmatpush1.msra.mxu0 %v1280
        %1341 = vmatprep.subr.mxu0 0.0
        %1342 = vmatpush1.msra.mxu0 %v1279
        %1343 = vmatprep.subr.mxu0 0.0
        %1344 = vmatpush1.msra.mxu0 %v1278
        %1345 = vmatprep.subr.mxu0 0.0
        %1346 = vmatpush1.msra.mxu0 %v1277
        %1347 = vmatprep.subr.mxu0 0.0
        %1348 = vmatpush1.msra.mxu0 %v1276
        %1349 = vmatprep.subr.mxu0 0.0
        %1350 = vmatpush1.msra.mxu0 %v1275
        %1351 = vmatprep.subr.mxu0 0.0
        %1352 = vmatpush1.msra.mxu0 %v1274
        %1353 = vmatprep.subr.mxu0 0.0
        %1354 = vmatpush1.msra.mxu0 %v1273
        %1355 = vmatprep.subr.mxu0 0.0
        %1356 = vmatpush1.msra.mxu0 %v1272
        %1357 = vmatprep.subr.mxu0 0.0
        %1358 = vmatpush1.msra.mxu0 %v1271
        %1359 = vmatprep.subr.mxu0 0.0
        %1360 = vmatpush1.msra.mxu0 %v1270
        %1361 = vmatprep.subr.mxu0 0.0
        %1362 = vmatpush1.msra.mxu0 %v1269
        %1363 = vmatprep.subr.mxu0 0.0
        %1364 = vmatpush1.msra.mxu0 %v1268
        %1365 = vmatprep.subr.mxu0 0.0
        %1366 = vmatpush1.msra.mxu0 %v1267
        %1367 = vmatprep.subr.mxu0 0.0
        %1368 = vmatpush1.msra.mxu0 %v1266
        %1369 = vmatprep.subr.mxu0 0.0
        %1370 = vmatpush2.msra.mxu0 %v1297
        %1371 = vmatprep.subr.mxu0 0.0
        %1372 = vmatpush2.msra.mxu0 %v1296
        %1373 = vmatprep.subr.mxu0 0.0
        %1374 = vmatpush2.msra.mxu0 %v1295
        %1375 = vmatprep.subr.mxu0 0.0
        %1376 = vmatpush2.msra.mxu0 %v1294
        %1377 = vmatprep.subr.mxu0 0.0
        %1378 = vmatpush2.msra.mxu0 %v1293
        %1379 = vmatprep.subr.mxu0 0.0
        %1380 = vmatpush2.msra.mxu0 %v1292
        %1381 = vmatprep.subr.mxu0 0.0
        %1382 = vmatpush2.msra.mxu0 %v1291
        %1383 = vmatprep.subr.mxu0 0.0
        %1384 = vmatpush2.msra.mxu0 %v1290
        %1385 = vmatprep.subr.mxu0 0.0
        %1386 = vmatpush2.msra.mxu0 %v1289
        %1387 = vmatprep.subr.mxu0 0.0
        %1388 = vmatpush2.msra.mxu0 %v1288
        %1389 = vmatprep.subr.mxu0 0.0
        %1390 = vmatpush2.msra.mxu0 %v1287
        %1391 = vmatprep.subr.mxu0 0.0
        %1392 = vmatpush2.msra.mxu0 %v1286
        %1393 = vmatprep.subr.mxu0 0.0
        %1394 = vmatpush2.msra.mxu0 %v1285
        %1395 = vmatprep.subr.mxu0 0.0
        %1396 = vmatpush2.msra.mxu0 %v1284
        %1397 = vmatprep.subr.mxu0 0.0
        %1398 = vmatpush2.msra.mxu0 %v1283
        %1399 = vmatprep.subr.mxu0 0.0
        %1400 = vmatpush2.msra.mxu0 %v1282
        %1401 = vmatprep.mubr.f32.mxu0 %v1259
        %1402 = vmatmul.mubr.f32.gmra.mxu0 %v1258
        %v1403 = vpop.f32.mrf.mxu0
        %v1404 = vadd.f32 %v1335, %v1403
        %v1405 = vpop.f32.mrf.mxu0
        %1406 = vmatprep.mubr.f32.mxu0 %v1263
        %1407 = vmatmul.mubr.f32.gmra.mxu0 %v1262
        %v1408 = vpop.f32.mrf.mxu0
        %v1409 = vadd.f32 %v1335, %v1408
        %v1410 = vpop.f32.mrf.mxu0
        %1411 = vdwg.mxu0
        %1412 = vmatprep.subr.mxu0 0.0
        %1413 = vmatpush1.msra.mxu0 %v1313
        %1414 = vmatprep.subr.mxu0 0.0
        %1415 = vmatpush1.msra.mxu0 %v1312
        %1416 = vmatprep.subr.mxu0 0.0
        %1417 = vmatpush1.msra.mxu0 %v1311
        %1418 = vmatprep.subr.mxu0 0.0
        %1419 = vmatpush1.msra.mxu0 %v1310
        %1420 = vmatprep.subr.mxu0 0.0
        %1421 = vmatpush1.msra.mxu0 %v1309
        %1422 = vmatprep.subr.mxu0 0.0
        %1423 = vmatpush1.msra.mxu0 %v1308
        %1424 = vmatprep.subr.mxu0 0.0
        %1425 = vmatpush1.msra.mxu0 %v1307
        %1426 = vmatprep.subr.mxu0 0.0
        %1427 = vmatpush1.msra.mxu0 %v1306
        %1428 = vmatprep.subr.mxu0 0.0
        %1429 = vmatpush1.msra.mxu0 %v1305
        %1430 = vmatprep.subr.mxu0 0.0
        %1431 = vmatpush1.msra.mxu0 %v1304
        %1432 = vmatprep.subr.mxu0 0.0
        %1433 = vmatpush1.msra.mxu0 %v1303
        %1434 = vmatprep.subr.mxu0 0.0
        %1435 = vmatpush1.msra.mxu0 %v1302
        %1436 = vmatprep.subr.mxu0 0.0
        %1437 = vmatpush1.msra.mxu0 %v1301
        %1438 = vmatprep.subr.mxu0 0.0
        %1439 = vmatpush1.msra.mxu0 %v1300
        %1440 = vmatprep.subr.mxu0 0.0
        %1441 = vmatpush1.msra.mxu0 %v1299
        %1442 = vmatprep.subr.mxu0 0.0
        %1443 = vmatpush1.msra.mxu0 %v1298
        %1444 = vmatprep.subr.mxu0 0.0
        %1445 = vmatpush2.msra.mxu0 %v1329
        %1446 = vmatprep.subr.mxu0 0.0
        %1447 = vmatpush2.msra.mxu0 %v1328
        %1448 = vmatprep.subr.mxu0 0.0
        %1449 = vmatpush2.msra.mxu0 %v1327
        %1450 = vmatprep.subr.mxu0 0.0
        %1451 = vmatpush2.msra.mxu0 %v1326
        %1452 = vmatprep.subr.mxu0 0.0
        %1453 = vmatpush2.msra.mxu0 %v1325
        %1454 = vmatprep.subr.mxu0 0.0
        %1455 = vmatpush2.msra.mxu0 %v1324
        %1456 = vmatprep.subr.mxu0 0.0
        %1457 = vmatpush2.msra.mxu0 %v1323
        %1458 = vmatprep.subr.mxu0 0.0
        %1459 = vmatpush2.msra.mxu0 %v1322
        %1460 = vmatprep.subr.mxu0 0.0
        %1461 = vmatpush2.msra.mxu0 %v1321
        %1462 = vmatprep.subr.mxu0 0.0
        %1463 = vmatpush2.msra.mxu0 %v1320
        %1464 = vmatprep.subr.mxu0 0.0
        %1465 = vmatpush2.msra.mxu0 %v1319
        %1466 = vmatprep.subr.mxu0 0.0
        %1467 = vmatpush2.msra.mxu0 %v1318
        %1468 = vmatprep.subr.mxu0 0.0
        %1469 = vmatpush2.msra.mxu0 %v1317
        %1470 = vmatprep.subr.mxu0 0.0
        %1471 = vmatpush2.msra.mxu0 %v1316
        %1472 = vmatprep.subr.mxu0 0.0
        %1473 = vmatpush2.msra.mxu0 %v1315
        %1474 = vmatprep.subr.mxu0 0.0
        %1475 = vmatpush2.msra.mxu0 %v1314
        %1476 = vmatprep.mubr.f32.mxu0 %v1261
        %1477 = vmatmul.mubr.f32.gmra.mxu0 %v1260
        %v1478 = vpop.f32.mrf.mxu0
        %v1479 = vadd.f32 %v1404, %v1478
        %v1480 = vpop.f32.mrf.mxu0
        %1481 = vmatprep.mubr.f32.mxu0 %v1265
        %1482 = vmatmul.mubr.f32.gmra.mxu0 %v1264
        %v1483 = vpop.f32.mrf.mxu0
        %v1484 = vadd.f32 %v1409, %v1483
        %v1485 = vpop.f32.mrf.mxu0
        %1486 = vdwg.mxu0
        %1487 = vst [vmem:[%s353] sm:$0xff] %v1479
        %1488 = vst [vmem:[%s353 + $0x8] sm:$0xff] %v1484
        %s1489 = sand.u32 %s186, 1
        %s1490 = scalar_lea.sflag [#allocation4], %s1489
        %s1491 = sand.u32 %s186, 1
        %s1492 = smul.addr %s1491, 16
        %s1493 = scalar_lea.vmem [#allocation11], %s1492
        // Predicated region
        $region69: #{tpu_custom_call.1} parent=47 // pred_check
          %p1494 = pneg %p196
        $region70: #{tpu_custom_call.1} parent=47 // pred_check_branch
          %1496 = sbr.rel (%p1494) target = $region72
        $region71: #{tpu_custom_call.1} parent=47 // pred_region
          %s1497 = smul.u32 2, %s26
          %s1499 = ssub.s32 256, 256
          %1500 = vsyncadd %s1490, %s1499
          %s1501 = smul.addr %s1497, 128
          %s1502 = scalar_lea.hbm %s7, %s1501
          %s1503 = sshll.u32 %s1493, 4
          %s1504 = int_to_ptr.vmem [resolvable:$true] %s1503
          %1509 = dma.vmem_to_hbm [thread:$0]  %s1504, 256, %s1502, %s1490, 128, 128, 8
        $region72: #{tpu_custom_call.1} parent=47 // pred_fallthru
          _
      $region48: #{tpu_custom_call.1} parent=5 // pred_fallthru
        _
      %p1510 = scmp.le.s32.totalorder 2, %s21
      // Predicated region
      $region73: #{tpu_custom_call.1} parent=5 // pred_check
        %p1511 = pneg %p1510
      $region74: #{tpu_custom_call.1} parent=5 // pred_check_branch
        %1513 = sbr.rel (%p1511) target = $region76
      $region75: #{tpu_custom_call.1} parent=5 // pred_region
        %s1514 = ssub.s32 %s21, 2
        // Predicated region
        $region77: #{tpu_custom_call.1} parent=75 // pred_check
          %p1515 = pneg %p202
        $region78: #{tpu_custom_call.1} parent=75 // pred_check_branch
          %1517 = sbr.rel (%p1515) target = $region80
        $region79: #{tpu_custom_call.1} parent=75 // pred_region
          %s1518 = sand.u32 %s187, 1
          %s1519 = scalar_lea.sflag [#allocation4], %s1518
          %s1520 = sand.u32 %s187, 1
          %s1521 = smul.addr %s1520, 16
          %s1522 = scalar_lea.vmem [#allocation11], %s1521
          %1523 = dma.done %s1519, 256
        $region80: #{tpu_custom_call.1} parent=75 // pred_fallthru
          _
      $region76: #{tpu_custom_call.1} parent=5 // pred_fallthru
        _
    $region6: #{tpu_custom_call.1} parent=1 // loop_footer
      %s25 = sadd.s32 1, %s21
    $region7: #{tpu_custom_call.1} parent=1 // loop_footer_branch
      %20 = sbr.rel target = $region3
    $region8: #{tpu_custom_call.1} parent=1 // loop_exit
      _
    %1524 = vsyncpa [#allocation3], 1
    %s1525 = scalar_lea.sflag [#allocation3], 1
    %1526 = vsyncpa %s1525, 1
    %1527 = vsyncpa [#allocation6], 1
    %1528 = vsyncpa [#allocation9], 1
    %1529 = vsyncpa [#allocation4], 1
    %s1530 = scalar_lea.sflag [#allocation4], 1
    %1531 = vsyncpa %s1530, 1

</llo_original>
